<compile_context>
chip_gen: v6e
topology: v6e:2x2x1
jax: 0.10.0
libtpu: 0.0.40
codegen_flags: <defaults>
</compile_context>

<pallas_src>
import functools
import numpy as np
import jax
import jax.numpy as jnp
from jax import lax
from jax.experimental import pallas as pl
from jax.experimental.pallas import tpu as pltpu

_MIB = 1024 * 1024
_ROW_CONTRACT = (((0,), (0,)), ((), ()))   # (n, dX) x (n, dY) -> (dX, dY)


def _round_up(x, m):
    return ((x + m - 1) // m) * m


def _vmem_capacity_bytes():
    """Physical VMEM per core (generation aware).  Conservative fallback."""
    try:
        info = pltpu.get_tpu_info()
        for attr in ("vmem_capacity_bytes", "vmem_bytes", "vmem_size_bytes"):
            v = getattr(info, attr, None)
            if v:
                return int(v)
    except Exception:
        pass
    return 64 * _MIB   # v7x-sized fallback: always safe, possibly suboptimal


def _finalize_from_grams(gst, gss, gtt, ms, mt, n_rows, eps):
    """Centering identity + Frobenius norms on small (d, d) Grams.

    Works on 1/n-scaled Grams for f32 headroom; eps is scaled to keep the
    original  norm(G) + eps  semantics exactly.
    """
    inv_n = jnp.float32(1.0 / float(n_rows))
    gst_c = gst * inv_n - jnp.outer(ms, mt)
    gss_c = gss * inv_n - jnp.outer(ms, ms)
    gtt_c = gtt * inv_n - jnp.outer(mt, mt)
    eps_n = jnp.float32(eps) * inv_n
    num = jnp.sqrt(jnp.sum(gst_c * gst_c))
    den1 = jnp.sqrt(jnp.sum(gss_c * gss_c)) + eps_n
    den2 = jnp.sqrt(jnp.sum(gtt_c * gtt_c)) + eps_n
    return 1.0 - num / jnp.sqrt(den1 * den2)


# ---------------------------------------------------------------------------
# Path A, variant 1: full-Gram VMEM scratch accumulators, in-kernel finalize.
# ---------------------------------------------------------------------------
def _cka_fused_kernel(shs_ref, sht_ref, s_ref, t_ref, out_ref,
                      gst_ref, gss_ref, gtt_ref, sums_ref, sumt_ref,
                      *, n_rows, eps):
    i = pl.program_id(0)

    @pl.when(i == 0)
    def _():
        gst_ref[...] = jnp.zeros_like(gst_ref)
        gss_ref[...] = jnp.zeros_like(gss_ref)
        gtt_ref[...] = jnp.zeros_like(gtt_ref)
        sums_ref[...] = jnp.zeros_like(sums_ref)
        sumt_ref[...] = jnp.zeros_like(sumt_ref)

    # Static column shift (anti-cancellation); padded rows equal the shift so
    # they become exact zeros here and contribute nothing.
    s = s_ref[...] - shs_ref[...]                 # (br, dSp) native dtype
    t = t_ref[...] - sht_ref[...]                 # (br, dTp)
    ones = jnp.ones((1, s.shape[0]), dtype=s.dtype)

    # Uncentered Grams, contracted over rows -> MXU, f32 accumulation.
    gst_ref[...] += lax.dot_general(s, t, _ROW_CONTRACT,
                                    preferred_element_type=jnp.float32)
    gss_ref[...] += lax.dot_general(s, s, _ROW_CONTRACT,
                                    preferred_element_type=jnp.float32)
    gtt_ref[...] += lax.dot_general(t, t, _ROW_CONTRACT,
                                    preferred_element_type=jnp.float32)
    # Per-column sums via a ones-row MXU matmul (no full-tile VPU f32 cast).
    sums_ref[...] += jnp.dot(ones, s, preferred_element_type=jnp.float32)
    sumt_ref[...] += jnp.dot(ones, t, preferred_element_type=jnp.float32)

    @pl.when(i == pl.num_programs(0) - 1)
    def _():
        inv_n = jnp.float32(1.0 / float(n_rows))
        ms = sums_ref[...] * inv_n                # (1, dSp) column means
        mt = sumt_ref[...] * inv_n                # (1, dTp)
        # 1/n-scaled centered Grams:  X^T Y / n  -  mean_x^T mean_y
        gst = gst_ref[...] * inv_n - lax.dot_general(
            ms, mt, _ROW_CONTRACT, preferred_element_type=jnp.float32)
        gss = gss_ref[...] * inv_n - lax.dot_general(
            ms, ms, _ROW_CONTRACT, preferred_element_type=jnp.float32)
        gtt = gtt_ref[...] * inv_n - lax.dot_general(
            mt, mt, _ROW_CONTRACT, preferred_element_type=jnp.float32)
        eps_n = jnp.float32(eps) * inv_n
        num = jnp.sqrt(jnp.sum(gst * gst, keepdims=True))            # (1, 1)
        den1 = jnp.sqrt(jnp.sum(gss * gss, keepdims=True)) + eps_n
        den2 = jnp.sqrt(jnp.sum(gtt * gtt, keepdims=True)) + eps_n
        out_ref[...] = 1.0 - num / jnp.sqrt(den1 * den2)


# ---------------------------------------------------------------------------
# Path A, variant 2: row-sharded partial Grams (v7x megacore), JAX finalize.
# ---------------------------------------------------------------------------
def _cka_partial_kernel(shs_ref, sht_ref, s_ref, t_ref,
                        gst_ref, gss_ref, gtt_ref, sums_ref, sumt_ref):
    i = pl.program_id(1)       # row step within this shard

    @pl.when(i == 0)
    def _():
        gst_ref[...] = jnp.zeros_like(gst_ref)
        gss_ref[...] = jnp.zeros_like(gss_ref)
        gtt_ref[...] = jnp.zeros_like(gtt_ref)
        sums_ref[...] = jnp.zeros_like(sums_ref)
        sumt_ref[...] = jnp.zeros_like(sumt_ref)

    s = s_ref[...] - shs_ref[...]
    t = t_ref[...] - sht_ref[...]
    ones = jnp.ones((1, s.shape[0]), dtype=s.dtype)

    gst_ref[...] += lax.dot_general(s, t, _ROW_CONTRACT,
                                    preferred_element_type=jnp.float32)
    gss_ref[...] += lax.dot_general(s, s, _ROW_CONTRACT,
                                    preferred_element_type=jnp.float32)
    gtt_ref[...] += lax.dot_general(t, t, _ROW_CONTRACT,
                                    preferred_element_type=jnp.float32)
    sums_ref[...] += jnp.dot(ones, s, preferred_element_type=jnp.float32)
    sumt_ref[...] += jnp.dot(ones, t, preferred_element_type=jnp.float32)


# ---------------------------------------------------------------------------
# Path B kernels: symmetric Gram over triangular block pairs + cross Gram.
# Both accumulate directly into the resident output block (no acc scratch).
# ---------------------------------------------------------------------------
def _sym_gram_kernel(bi_ref, bj_ref, xi_ref, xj_ref, g_ref):
    del bi_ref, bj_ref          # only used inside the index maps
    k = pl.program_id(1)

    @pl.when(k == 0)
    def _():
        g_ref[...] = jnp.zeros_like(g_ref)

    g_ref[...] += lax.dot_general(xi_ref[...], xj_ref[...], _ROW_CONTRACT,
                                  preferred_element_type=jnp.float32)


def _cross_gram_kernel(s_ref, t_ref, g_ref):
    k = pl.program_id(2)

    @pl.when(k == 0)
    def _():
        g_ref[...] = jnp.zeros_like(g_ref)

    g_ref[...] += lax.dot_general(s_ref[...], t_ref[...], _ROW_CONTRACT,
                                  preferred_element_type=jnp.float32)


def _sym_gram(X, bf, br, vmem_limit):
    """Upper-block-triangle Gram of X (rows x features), mirrored to full."""
    n_pad, dp = X.shape
    nb = dp // bf
    pairs_i, pairs_j = [], []
    for a in range(nb):
        for b in range(a, nb):
            pairs_i.append(a)
            pairs_j.append(b)
    bi = jnp.asarray(pairs_i, dtype=jnp.int32)
    bj = jnp.asarray(pairs_j, dtype=jnp.int32)
    n_pairs = len(pairs_i)
    steps = n_pad // br
    itemsize = jnp.dtype(X.dtype).itemsize

    g = pl.pallas_call(
        _sym_gram_kernel,
        out_shape=jax.ShapeDtypeStruct((dp, dp), jnp.float32),
        grid_spec=pltpu.PrefetchScalarGridSpec(
            num_scalar_prefetch=2,
            grid=(n_pairs, steps),
            in_specs=[pl.BlockSpec((br, bf), lambda p, k, bi_r, bj_r: (k, bi_r[p])),
                      pl.BlockSpec((br, bf), lambda p, k, bi_r, bj_r: (k, bj_r[p]))],
            out_specs=pl.BlockSpec((bf, bf),
                                   lambda p, k, bi_r, bj_r: (bi_r[p], bj_r[p]))),
        compiler_params=pltpu.CompilerParams(
            dimension_semantics=("arbitrary", "arbitrary"),
            vmem_limit_bytes=vmem_limit),
        cost_estimate=pl.CostEstimate(
            flops=int(2 * n_pad * bf * bf * n_pairs),
            transcendentals=0,
            bytes_accessed=int(2 * n_pad * bf * n_pairs * itemsize + dp * dp * 4)),
    )(bi, bj, X, X)

    # Mirror the computed upper block-triangle; lower blocks were never written.
    r = lax.broadcasted_iota(jnp.int32, (dp, dp), 0) // bf
    c = lax.broadcasted_iota(jnp.int32, (dp, dp), 1) // bf
    return jnp.where(r <= c, g, g.T)


def _cross_gram(S, T, bfS, bfT, br, vmem_limit):
    n_pad, dSp = S.shape
    _, dTp = T.shape
    nbS, nbT = dSp // bfS, dTp // bfT
    steps = n_pad // br
    itemsize = jnp.dtype(S.dtype).itemsize

    return pl.pallas_call(
        _cross_gram_kernel,
        out_shape=jax.ShapeDtypeStruct((dSp, dTp), jnp.float32),
        grid_spec=pltpu.PrefetchScalarGridSpec(
            num_scalar_prefetch=0,
            grid=(nbS, nbT, steps),
            in_specs=[pl.BlockSpec((br, bfS), lambda i, j, k: (k, i)),
                      pl.BlockSpec((br, bfT), lambda i, j, k: (k, j))],
            out_specs=pl.BlockSpec((bfS, bfT), lambda i, j, k: (i, j))),
        compiler_params=pltpu.CompilerParams(
            dimension_semantics=("parallel", "parallel", "arbitrary"),
            vmem_limit_bytes=vmem_limit),
        cost_estimate=pl.CostEstimate(
            flops=int(2 * n_pad * dSp * dTp),
            transcendentals=0,
            bytes_accessed=int(n_pad * (dSp * nbT + dTp * nbS) * itemsize
                               + dSp * dTp * 4)),
    )(S, T)


# ---------------------------------------------------------------------------
# Wrapper
# ---------------------------------------------------------------------------
def cka_loss(SH, TH, eps=1e-8, *, block_rows=1024, feature_block=None,
             num_row_shards=None, force_tiled=False, stream_bf16=False,
             shift_center=True):
    dS = int(SH.shape[-1])
    dT = int(TH.shape[-1])
    S = jnp.reshape(SH, (-1, dS))
    T = jnp.reshape(TH, (-1, dT))
    n = int(S.shape[0])
    assert int(T.shape[0]) == n, "SH and TH must flatten to the same row count"

    # No f64 MXU on TPU; keep native low precision otherwise (bf16 stays bf16).
    if S.dtype == jnp.float64:
        S = S.astype(jnp.float32)
    if T.dtype == jnp.float64:
        T = T.astype(jnp.float32)
    if S.dtype != T.dtype:
        cdt = jnp.promote_types(S.dtype, T.dtype)
        S = S.astype(cdt)
        T = T.astype(cdt)
    if stream_bf16 and S.dtype == jnp.float32:
        # Opt-in: halve HBM bytes / double MXU rate; accumulation stays f32.
        S = S.astype(jnp.bfloat16)
        T = T.astype(jnp.bfloat16)
    itemsize = jnp.dtype(S.dtype).itemsize
    row_align = 16 if itemsize < 4 else 8

    vmem_cap = _vmem_capacity_bytes()
    budget = int(0.75 * vmem_cap)           # user-buffer budget, leaves headroom

    dSp = _round_up(dS, 128)
    dTp = _round_up(dT, 128)
    gram_bytes = 4 * (dSp * dTp + dSp * dSp + dTp * dTp + 2 * (dSp + dTp))

    def _path_a_bytes(b):
        # grams + 2 streams x 2 buffers of (b, d) inputs + tiny shift vectors
        return gram_bytes + 4 * b * (dSp + dTp) * itemsize \
            + 2 * (dSp + dTp) * itemsize

    min_rows = 4 * row_align
    use_tiled = force_tiled or (_path_a_bytes(min_rows) > budget)

    if not use_tiled:
        # ------------------------- Path A -------------------------
        if num_row_shards is None:
            # v7x-sized VMEM => 2 TensorCores per chip: split rows across them.
            num_row_shards = 2 if vmem_cap <= 80 * _MIB else 1
        shards = max(1, int(num_row_shards))

        # Biggest row tile that fits the generation-aware VMEM budget.
        br = _round_up(min(int(block_rows), max(n, row_align)), row_align)
        while _path_a_bytes(br) > budget and br > min_rows:
            br = max(min_rows, _round_up(br // 2, row_align))
        shards = max(1, min(shards, -(-n // br)))
        n_pad = _round_up(n, br * shards)

        # Static column shift (anti-cancellation) from the first rows.
        if shift_center:
            r = min(n, 256)
            shift_s = jnp.mean(S[:r], axis=0, keepdims=True,
                               dtype=jnp.float32).astype(S.dtype)
            shift_t = jnp.mean(T[:r], axis=0, keepdims=True,
                               dtype=jnp.float32).astype(T.dtype)
        else:
            shift_s = jnp.zeros((1, dS), S.dtype)
            shift_t = jnp.zeros((1, dT), T.dtype)
        shift_s = jnp.pad(shift_s, ((0, 0), (0, dSp - dS)))
        shift_t = jnp.pad(shift_t, ((0, 0), (0, dTp - dT)))

        # Lane-dense feature padding (zero columns are exact after centering).
        if dSp != dS:
            S = jnp.pad(S, ((0, 0), (0, dSp - dS)))
        if dTp != dT:
            T = jnp.pad(T, ((0, 0), (0, dTp - dT)))
        # Row padding uses the shift value so padded rows vanish in-kernel.
        if n_pad != n:
            S = jnp.concatenate(
                [S, jnp.broadcast_to(shift_s, (n_pad - n, dSp))], axis=0)
            T = jnp.concatenate(
                [T, jnp.broadcast_to(shift_t, (n_pad - n, dTp))], axis=0)

        flops = 2 * n_pad * (dSp * dTp + dSp * dSp + dTp * dTp + dSp + dTp)
        vmem_limit = int(min(vmem_cap,
                             max(32 * _MIB, int(1.3 * _path_a_bytes(br)))))

        if shards == 1:
            # Variant 1: in-kernel finalize, scalar output.
            kernel = functools.partial(_cka_fused_kernel, n_rows=n,
                                       eps=float(eps))
            bytes_acc = n_pad * (dSp + dTp) * itemsize + 4
            out = pl.pallas_call(
                kernel,
                out_shape=jax.ShapeDtypeStruct((1, 1), jnp.float32),
                grid_spec=pltpu.PrefetchScalarGridSpec(
                    num_scalar_prefetch=0,
                    grid=(n_pad // br,),
                    in_specs=[pl.BlockSpec((1, dSp), lambda i: (0, 0)),
                              pl.BlockSpec((1, dTp), lambda i: (0, 0)),
                              pl.BlockSpec((br, dSp), lambda i: (i, 0)),
                              pl.BlockSpec((br, dTp), lambda i: (i, 0))],
                    out_specs=pl.BlockSpec((1, 1), lambda i: (0, 0)),
                    scratch_shapes=[pltpu.VMEM((dSp, dTp), jnp.float32),
                                    pltpu.VMEM((dSp, dSp), jnp.float32),
                                    pltpu.VMEM((dTp, dTp), jnp.float32),
                                    pltpu.VMEM((1, dSp), jnp.float32),
                                    pltpu.VMEM((1, dTp), jnp.float32)]),
                compiler_params=pltpu.CompilerParams(
                    dimension_semantics=("arbitrary",),
                    vmem_limit_bytes=vmem_limit),
                cost_estimate=pl.CostEstimate(flops=int(flops),
                                              transcendentals=8,
                                              bytes_accessed=int(bytes_acc)),
            )(shift_s, shift_t, S, T)
            return out[0, 0]

        # Variant 2: per-shard partial Grams, both TensorCores, JAX finalize.
        steps = n_pad // (br * shards)
        partial_bytes = shards * 4 * (dSp * dTp + dSp * dSp + dTp * dTp
                                      + dSp + dTp)
        bytes_acc = n_pad * (dSp + dTp) * itemsize + partial_bytes
        out_shapes = (jax.ShapeDtypeStruct((shards, dSp, dTp), jnp.float32),
                      jax.ShapeDtypeStruct((shards, dSp, dSp), jnp.float32),
                      jax.ShapeDtypeStruct((shards, dTp, dTp), jnp.float32),
                      jax.ShapeDtypeStruct((shards, 1, dSp), jnp.float32),
                      jax.ShapeDtypeStruct((shards, 1, dTp), jnp.float32))
        out_specs = [
            pl.BlockSpec((None, dSp, dTp), lambda s, i: (s, 0, 0)),
            pl.BlockSpec((None, dSp, dSp), lambda s, i: (s, 0, 0)),
            pl.BlockSpec((None, dTp, dTp), lambda s, i: (s, 0, 0)),
            pl.BlockSpec((None, 1, dSp), lambda s, i: (s, 0, 0)),
            pl.BlockSpec((None, 1, dTp), lambda s, i: (s, 0, 0)),
        ]
        in_specs = [
            pl.BlockSpec((1, dSp), lambda s, i: (0, 0)),
            pl.BlockSpec((1, dTp), lambda s, i: (0, 0)),
            pl.BlockSpec((br, dSp), lambda s, i: (s * steps + i, 0)),
            pl.BlockSpec((br, dTp), lambda s, i: (s * steps + i, 0)),
        ]
        gst_p, gss_p, gtt_p, sums_p, sumt_p = pl.pallas_call(
            _cka_partial_kernel,
            out_shape=out_shapes,
            grid_spec=pltpu.PrefetchScalarGridSpec(
                num_scalar_prefetch=0,
                grid=(shards, steps),
                in_specs=in_specs,
                out_specs=out_specs),
            compiler_params=pltpu.CompilerParams(
                dimension_semantics=("parallel", "arbitrary"),
                vmem_limit_bytes=vmem_limit),
            cost_estimate=pl.CostEstimate(flops=int(flops),
                                          transcendentals=0,
                                          bytes_accessed=int(bytes_acc)),
        )(shift_s, shift_t, S, T)

        nf = jnp.float32(n)
        ms = jnp.sum(sums_p, axis=0)[0] / nf      # (dSp,)
        mt = jnp.sum(sumt_p, axis=0)[0] / nf      # (dTp,)
        return _finalize_from_grams(jnp.sum(gst_p, axis=0),
                                    jnp.sum(gss_p, axis=0),
                                    jnp.sum(gtt_p, axis=0),
                                    ms, mt, n, eps)

    # --------------------------- Path B ---------------------------
    bf_cap = int(feature_block) if feature_block else \
        (1024 if vmem_cap <= 80 * _MIB else 2048)
    bf_cap = max(128, _round_up(bf_cap, 128))

    def _feat(d):
        nb = -(-d // bf_cap)
        bf = _round_up(-(-d // nb), 128)
        return bf, nb * bf

    bfS, dSp_b = _feat(dS)
    bfT, dTp_b = _feat(dT)
    bfmax = max(bfS, bfT)

    def _path_b_bytes(b):
        # 2 streams x 2 buffers of inputs + double-buffered resident out block
        return 4 * b * (bfS + bfT) * itemsize + 3 * bfmax * bfmax * 4

    br_b = _round_up(min(int(block_rows), max(n, row_align)), row_align)
    while _path_b_bytes(br_b) > budget and br_b > min_rows:
        br_b = max(min_rows, _round_up(br_b // 2, row_align))
    n_pad = _round_up(n, br_b)

    # Column means (fused f32 reduction; one extra read pass of S and T).
    nf = jnp.float32(n)
    ms = jnp.sum(S, axis=0, dtype=jnp.float32) / nf
    mt = jnp.sum(T, axis=0, dtype=jnp.float32) / nf

    Sp = jnp.pad(S, ((0, n_pad - n), (0, dSp_b - dS))) \
        if (n_pad != n or dSp_b != dS) else S
    Tp = jnp.pad(T, ((0, n_pad - n), (0, dTp_b - dT))) \
        if (n_pad != n or dTp_b != dT) else T

    vmem_limit = int(min(vmem_cap,
                         max(32 * _MIB, int(1.3 * _path_b_bytes(br_b)))))

    gss_full = _sym_gram(Sp, bfS, br_b, vmem_limit)
    gtt_full = _sym_gram(Tp, bfT, br_b, vmem_limit)
    gst_full = _cross_gram(Sp, Tp, bfS, bfT, br_b, vmem_limit)

    return _finalize_from_grams(gst_full[:dS, :dT], gss_full[:dS, :dS],
                                gtt_full[:dT, :dT], ms, mt, n, eps)


# ---------------------------------------------------------------------------
# Reference (float64, mirrors the PyTorch module)
# ---------------------------------------------------------------------------
def _reference_cka(SH, TH, eps):
    S = np.asarray(SH, dtype=np.float64).reshape(-1, SH.shape[-1])
    T = np.asarray(TH, dtype=np.float64).reshape(-1, TH.shape[-1])
    S = S - S.mean(0, keepdims=True)
    T = T - T.mean(0, keepdims=True)
    num = np.linalg.norm(S.T @ T, 'fro')
    den1 = np.linalg.norm(S.T @ S, 'fro') + eps
    den2 = np.linalg.norm(T.T @ T, 'fro') + eps
    return 1.0 - num / np.sqrt(den1 * den2)


if __name__ == "__main__":
    key = jax.random.PRNGKey(0)
    k1, k2 = jax.random.split(key)
    # Student hidden states (batch=2, seq=8, hidden=32), teacher hidden=24.
    SH = jax.random.normal(k1, (2, 8, 32), dtype=jnp.float32)
    TH = jax.random.normal(k2, (2, 8, 24), dtype=jnp.float32)
    eps = 1e-8

    ref = _reference_cka(np.asarray(SH), np.asarray(TH), eps)

    # Path A, variant 1: fused in-kernel finalize.
    loss_a = jax.block_until_ready(cka_loss(SH, TH, eps=eps, num_row_shards=1))
    assert np.allclose(float(loss_a), ref, rtol=1e-4, atol=1e-5), (float(loss_a), ref)

    # Path A, variant 2: row-sharded partial Grams (v7x megacore layout; runs
    # correctly -- just serialized -- on single-TensorCore chips).
    loss_s = jax.block_until_ready(
        cka_loss(SH, TH, eps=eps, num_row_shards=2, block_rows=8))
    assert np.allclose(float(loss_s), ref, rtol=1e-4, atol=1e-5), (float(loss_s), ref)

    # Path B: feature-tiled symmetric/cross Gram path (auto-selected for large d).
    loss_b = jax.block_until_ready(cka_loss(SH, TH, eps=eps, force_tiled=True))
    assert np.allclose(float(loss_b), ref, rtol=1e-4, atol=1e-5), (float(loss_b), ref)

    # bf16 inputs stream natively (no f32 up-cast copy in HBM); compare against
    # a reference computed from the same bf16-quantized inputs.  NOTE: bf16
    # streaming is not f64-exact parity with the PyTorch reference.
    SH16 = SH.astype(jnp.bfloat16)
    TH16 = TH.astype(jnp.bfloat16)
    ref16 = _reference_cka(np.asarray(SH16).astype(np.float32),
                           np.asarray(TH16).astype(np.float32), eps)
    loss16 = jax.block_until_ready(cka_loss(SH16, TH16, eps=eps))
    assert np.allclose(float(loss16), ref16, rtol=1e-3, atol=1e-3), (float(loss16), ref16)

    print("KERNEL_OK")
</pallas_src>

<mosaic_0001>
module attributes {stable_mosaic.version = 11 : i64} {
  func.func @_cka_fused_kernel(%arg0: i32, %arg1: memref<1x128xf32, #tpu.memory_space<vmem>>, %arg2: memref<1x128xf32, #tpu.memory_space<vmem>>, %arg3: memref<16x128xf32, #tpu.memory_space<vmem>>, %arg4: memref<16x128xf32, #tpu.memory_space<vmem>>, %arg5: memref<1x1xf32, #tpu.memory_space<vmem>>, %arg6: memref<128x128xf32, #tpu.memory_space<vmem>>, %arg7: memref<128x128xf32, #tpu.memory_space<vmem>>, %arg8: memref<128x128xf32, #tpu.memory_space<vmem>>, %arg9: memref<1x128xf32, #tpu.memory_space<vmem>>, %arg10: memref<1x128xf32, #tpu.memory_space<vmem>>) attributes {dimension_semantics = [#tpu.dimension_semantics<arbitrary>], iteration_bounds = array<i64: 1>, scalar_prefetch = 0 : i64, scratch_operands = 5 : i64, tpu.core_type = #tpu.core_type<tc>, window_params = [{pipeline_mode = #tpu.pipeline_mode<synchronous>, transform_indices = @transform_0, window_bounds = array<i64: 1, 128>}, {pipeline_mode = #tpu.pipeline_mode<synchronous>, transform_indices = @transform_1, window_bounds = array<i64: 1, 128>}, {transform_indices = @transform_2, window_bounds = array<i64: 16, 128>}, {transform_indices = @transform_3, window_bounds = array<i64: 16, 128>}, {pipeline_mode = #tpu.pipeline_mode<synchronous>, transform_indices = @transform_4, window_bounds = array<i64: 1, 1>}]} {
    %c0_i32 = arith.constant 0 : i32
    %0 = arith.cmpi eq, %arg0, %c0_i32 : i32
    %1 = arith.extui %0 : i1 to i32
    %c0_i32_0 = arith.constant 0 : i32
    %2 = arith.cmpi ne, %1, %c0_i32_0 : i32
    scf.if %2 {
      %cst_35 = arith.constant 0.000000e+00 : f32
      %35 = vector.broadcast %cst_35 : f32 to vector<128x128xf32>
      %c0_36 = arith.constant 0 : index
      %c0_37 = arith.constant 0 : index
      %36 = vector.load %arg6[%c0_36, %c0_37] : memref<128x128xf32, #tpu.memory_space<vmem>>, vector<128x128xf32>
      tpu.vector_store %arg6[%c0_36, %c0_37], %35 {strides = array<i32>} : memref<128x128xf32, #tpu.memory_space<vmem>>, vector<128x128xf32>,
      %cst_38 = arith.constant 0.000000e+00 : f32
      %37 = vector.broadcast %cst_38 : f32 to vector<128x128xf32>
      %c0_39 = arith.constant 0 : index
      %c0_40 = arith.constant 0 : index
      %38 = vector.load %arg7[%c0_39, %c0_40] : memref<128x128xf32, #tpu.memory_space<vmem>>, vector<128x128xf32>
      tpu.vector_store %arg7[%c0_39, %c0_40], %37 {strides = array<i32>} : memref<128x128xf32, #tpu.memory_space<vmem>>, vector<128x128xf32>,
      %cst_41 = arith.constant 0.000000e+00 : f32
      %39 = vector.broadcast %cst_41 : f32 to vector<128x128xf32>
      %c0_42 = arith.constant 0 : index
      %c0_43 = arith.constant 0 : index
      %40 = vector.load %arg8[%c0_42, %c0_43] : memref<128x128xf32, #tpu.memory_space<vmem>>, vector<128x128xf32>
      tpu.vector_store %arg8[%c0_42, %c0_43], %39 {strides = array<i32>} : memref<128x128xf32, #tpu.memory_space<vmem>>, vector<128x128xf32>,
      %cst_44 = arith.constant 0.000000e+00 : f32
      %41 = vector.broadcast %cst_44 : f32 to vector<1x128xf32>
      %c0_45 = arith.constant 0 : index
      %c0_46 = arith.constant 0 : index
      %42 = vector.load %arg9[%c0_45, %c0_46] : memref<1x128xf32, #tpu.memory_space<vmem>>, vector<1x128xf32>
      tpu.vector_store %arg9[%c0_45, %c0_46], %41 {strides = array<i32>} : memref<1x128xf32, #tpu.memory_space<vmem>>, vector<1x128xf32>,
      %cst_47 = arith.constant 0.000000e+00 : f32
      %43 = vector.broadcast %cst_47 : f32 to vector<1x128xf32>
      %c0_48 = arith.constant 0 : index
      %c0_49 = arith.constant 0 : index
      %44 = vector.load %arg10[%c0_48, %c0_49] : memref<1x128xf32, #tpu.memory_space<vmem>>, vector<1x128xf32>
      tpu.vector_store %arg10[%c0_48, %c0_49], %43 {strides = array<i32>} : memref<1x128xf32, #tpu.memory_space<vmem>>, vector<1x128xf32>,
    } else {
    }
    %c0 = arith.constant 0 : index
    %c0_1 = arith.constant 0 : index
    %3 = vector.load %arg3[%c0, %c0_1] : memref<16x128xf32, #tpu.memory_space<vmem>>, vector<16x128xf32>
    %c0_2 = arith.constant 0 : index
    %c0_3 = arith.constant 0 : index
    %4 = vector.load %arg1[%c0_2, %c0_3] : memref<1x128xf32, #tpu.memory_space<vmem>>, vector<1x128xf32>
    %5 = vector.broadcast %4 : vector<1x128xf32> to vector<16x128xf32>
    %6 = arith.subf %3, %5 : vector<16x128xf32>
    %c0_4 = arith.constant 0 : index
    %c0_5 = arith.constant 0 : index
    %7 = vector.load %arg4[%c0_4, %c0_5] : memref<16x128xf32, #tpu.memory_space<vmem>>, vector<16x128xf32>
    %c0_6 = arith.constant 0 : index
    %c0_7 = arith.constant 0 : index
    %8 = vector.load %arg2[%c0_6, %c0_7] : memref<1x128xf32, #tpu.memory_space<vmem>>, vector<1x128xf32>
    %9 = vector.broadcast %8 : vector<1x128xf32> to vector<16x128xf32>
    %10 = arith.subf %7, %9 : vector<16x128xf32>
    %cst = arith.constant 1.000000e+00 : f32
    %11 = vector.broadcast %cst : f32 to vector<1x16xf32>
    %c0_8 = arith.constant 0 : index
    %c0_9 = arith.constant 0 : index
    %12 = vector.load %arg6[%c0_8, %c0_9] : memref<128x128xf32, #tpu.memory_space<vmem>>, vector<128x128xf32>
    %cst_10 = arith.constant dense<0.000000e+00> : vector<128x128xf32>
    %13 = tpu.matmul %6, %10, %cst_10 {dimension_numbers = #tpu.dot_dimension_numbers<[0], [0], [1], [1], [0, 1, 1, 1], [], []>} : vector<16x128xf32>, vector<16x128xf32>, vector<128x128xf32> -> vector<128x128xf32>
    %14 = arith.addf %12, %13 : vector<128x128xf32>
    %c0_11 = arith.constant 0 : index
    %c0_12 = arith.constant 0 : index
    %15 = vector.load %arg6[%c0_11, %c0_12] : memref<128x128xf32, #tpu.memory_space<vmem>>, vector<128x128xf32>
    tpu.vector_store %arg6[%c0_11, %c0_12], %14 {strides = array<i32>} : memref<128x128xf32, #tpu.memory_space<vmem>>, vector<128x128xf32>,
    %c0_13 = arith.constant 0 : index
    %c0_14 = arith.constant 0 : index
    %16 = vector.load %arg7[%c0_13, %c0_14] : memref<128x128xf32, #tpu.memory_space<vmem>>, vector<128x128xf32>
    %cst_15 = arith.constant dense<0.000000e+00> : vector<128x128xf32>
    %17 = tpu.matmul %6, %6, %cst_15 {dimension_numbers = #tpu.dot_dimension_numbers<[0], [0], [1], [1], [0, 1, 1, 1], [], []>} : vector<16x128xf32>, vector<16x128xf32>, vector<128x128xf32> -> vector<128x128xf32>
    %18 = arith.addf %16, %17 : vector<128x128xf32>
    %c0_16 = arith.constant 0 : index
    %c0_17 = arith.constant 0 : index
    %19 = vector.load %arg7[%c0_16, %c0_17] : memref<128x128xf32, #tpu.memory_space<vmem>>, vector<128x128xf32>
    tpu.vector_store %arg7[%c0_16, %c0_17], %18 {strides = array<i32>} : memref<128x128xf32, #tpu.memory_space<vmem>>, vector<128x128xf32>,
    %c0_18 = arith.constant 0 : index
    %c0_19 = arith.constant 0 : index
    %20 = vector.load %arg8[%c0_18, %c0_19] : memref<128x128xf32, #tpu.memory_space<vmem>>, vector<128x128xf32>
    %cst_20 = arith.constant dense<0.000000e+00> : vector<128x128xf32>
    %21 = tpu.matmul %10, %10, %cst_20 {dimension_numbers = #tpu.dot_dimension_numbers<[0], [0], [1], [1], [0, 1, 1, 1], [], []>} : vector<16x128xf32>, vector<16x128xf32>, vector<128x128xf32> -> vector<128x128xf32>
    %22 = arith.addf %20, %21 : vector<128x128xf32>
    %c0_21 = arith.constant 0 : index
    %c0_22 = arith.constant 0 : index
    %23 = vector.load %arg8[%c0_21, %c0_22] : memref<128x128xf32, #tpu.memory_space<vmem>>, vector<128x128xf32>
    tpu.vector_store %arg8[%c0_21, %c0_22], %22 {strides = array<i32>} : memref<128x128xf32, #tpu.memory_space<vmem>>, vector<128x128xf32>,
    %c0_23 = arith.constant 0 : index
    %c0_24 = arith.constant 0 : index
    %24 = vector.load %arg9[%c0_23, %c0_24] : memref<1x128xf32, #tpu.memory_space<vmem>>, vector<1x128xf32>
    %cst_25 = arith.constant dense<0.000000e+00> : vector<1x128xf32>
    %25 = tpu.matmul %11, %6, %cst_25 {dimension_numbers = #tpu.dot_dimension_numbers<[1], [0], [0], [1], [0, 0, 1, 1], [], []>} : vector<1x16xf32>, vector<16x128xf32>, vector<1x128xf32> -> vector<1x128xf32>
    %26 = arith.addf %24, %25 : vector<1x128xf32>
    %c0_26 = arith.constant 0 : index
    %c0_27 = arith.constant 0 : index
    %27 = vector.load %arg9[%c0_26, %c0_27] : memref<1x128xf32, #tpu.memory_space<vmem>>, vector<1x128xf32>
    tpu.vector_store %arg9[%c0_26, %c0_27], %26 {strides = array<i32>} : memref<1x128xf32, #tpu.memory_space<vmem>>, vector<1x128xf32>,
    %c0_28 = arith.constant 0 : index
    %c0_29 = arith.constant 0 : index
    %28 = vector.load %arg10[%c0_28, %c0_29] : memref<1x128xf32, #tpu.memory_space<vmem>>, vector<1x128xf32>
    %cst_30 = arith.constant dense<0.000000e+00> : vector<1x128xf32>
    %29 = tpu.matmul %11, %10, %cst_30 {dimension_numbers = #tpu.dot_dimension_numbers<[1], [0], [0], [1], [0, 0, 1, 1], [], []>} : vector<1x16xf32>, vector<16x128xf32>, vector<1x128xf32> -> vector<1x128xf32>
    %30 = arith.addf %28, %29 : vector<1x128xf32>
    %c0_31 = arith.constant 0 : index
    %c0_32 = arith.constant 0 : index
    %31 = vector.load %arg10[%c0_31, %c0_32] : memref<1x128xf32, #tpu.memory_space<vmem>>, vector<1x128xf32>
    tpu.vector_store %arg10[%c0_31, %c0_32], %30 {strides = array<i32>} : memref<1x128xf32, #tpu.memory_space<vmem>>, vector<1x128xf32>,
    %c0_i32_33 = arith.constant 0 : i32
    %32 = arith.cmpi eq, %arg0, %c0_i32_33 : i32
    %33 = arith.extui %32 : i1 to i32
    %c0_i32_34 = arith.constant 0 : i32
    %34 = arith.cmpi ne, %33, %c0_i32_34 : i32
    scf.if %34 {
      %c0_35 = arith.constant 0 : index
      %c0_36 = arith.constant 0 : index
      %35 = vector.load %arg9[%c0_35, %c0_36] : memref<1x128xf32, #tpu.memory_space<vmem>>, vector<1x128xf32>
      %cst_37 = arith.constant 6.250000e-02 : f32
      %36 = vector.broadcast %cst_37 : f32 to vector<1x128xf32>
      %37 = arith.mulf %35, %36 : vector<1x128xf32>
      %c0_38 = arith.constant 0 : index
      %c0_39 = arith.constant 0 : index
      %38 = vector.load %arg10[%c0_38, %c0_39] : memref<1x128xf32, #tpu.memory_space<vmem>>, vector<1x128xf32>
      %cst_40 = arith.constant 6.250000e-02 : f32
      %39 = vector.broadcast %cst_40 : f32 to vector<1x128xf32>
      %40 = arith.mulf %38, %39 : vector<1x128xf32>
      %c0_41 = arith.constant 0 : index
      %c0_42 = arith.constant 0 : index
      %41 = vector.load %arg6[%c0_41, %c0_42] : memref<128x128xf32, #tpu.memory_space<vmem>>, vector<128x128xf32>
      %cst_43 = arith.constant 6.250000e-02 : f32
      %42 = vector.broadcast %cst_43 : f32 to vector<128x128xf32>
      %43 = arith.mulf %41, %42 : vector<128x128xf32>
      %cst_44 = arith.constant dense<0.000000e+00> : vector<128x128xf32>
      %44 = tpu.matmul %37, %40, %cst_44 {dimension_numbers = #tpu.dot_dimension_numbers<[0], [0], [1], [1], [0, 1, 1, 1], [], []>} : vector<1x128xf32>, vector<1x128xf32>, vector<128x128xf32> -> vector<128x128xf32>
      %45 = arith.subf %43, %44 : vector<128x128xf32>
      %c0_45 = arith.constant 0 : index
      %c0_46 = arith.constant 0 : index
      %46 = vector.load %arg7[%c0_45, %c0_46] : memref<128x128xf32, #tpu.memory_space<vmem>>, vector<128x128xf32>
      %cst_47 = arith.constant 6.250000e-02 : f32
      %47 = vector.broadcast %cst_47 : f32 to vector<128x128xf32>
      %48 = arith.mulf %46, %47 : vector<128x128xf32>
      %cst_48 = arith.constant dense<0.000000e+00> : vector<128x128xf32>
      %49 = tpu.matmul %37, %37, %cst_48 {dimension_numbers = #tpu.dot_dimension_numbers<[0], [0], [1], [1], [0, 1, 1, 1], [], []>} : vector<1x128xf32>, vector<1x128xf32>, vector<128x128xf32> -> vector<128x128xf32>
      %50 = arith.subf %48, %49 : vector<128x128xf32>
      %c0_49 = arith.constant 0 : index
      %c0_50 = arith.constant 0 : index
      %51 = vector.load %arg8[%c0_49, %c0_50] : memref<128x128xf32, #tpu.memory_space<vmem>>, vector<128x128xf32>
      %cst_51 = arith.constant 6.250000e-02 : f32
      %52 = vector.broadcast %cst_51 : f32 to vector<128x128xf32>
      %53 = arith.mulf %51, %52 : vector<128x128xf32>
      %cst_52 = arith.constant dense<0.000000e+00> : vector<128x128xf32>
      %54 = tpu.matmul %40, %40, %cst_52 {dimension_numbers = #tpu.dot_dimension_numbers<[0], [0], [1], [1], [0, 1, 1, 1], [], []>} : vector<1x128xf32>, vector<1x128xf32>, vector<128x128xf32> -> vector<128x128xf32>
      %55 = arith.subf %53, %54 : vector<128x128xf32>
      %cst_53 = arith.constant 9.99999993E-9 : f32
      %cst_54 = arith.constant 6.250000e-02 : f32
      %56 = arith.mulf %cst_53, %cst_54 : f32
      %57 = arith.mulf %45, %45 : vector<128x128xf32>
      %58 = vector.shape_cast %57 : vector<128x128xf32> to vector<1x128x128xf32>
      %cst_55 = arith.constant dense<0.000000e+00> : vector<1xf32>
      %59 = vector.multi_reduction <add>, %58, %cst_55 [1, 2] : vector<1x128x128xf32> to vector<1xf32>
      %60 = vector.shape_cast %59 : vector<1xf32> to vector<1x1x1xf32>
      %61 = vector.extract %60[0, 0, 0] : f32 from vector<1x1x1xf32>
      %62 = vector.broadcast %61 : f32 to vector<1x1xf32>
      %63 = math.sqrt %62 : vector<1x1xf32>
      %64 = arith.mulf %50, %50 : vector<128x128xf32>
      %65 = vector.shape_cast %64 : vector<128x128xf32> to vector<1x128x128xf32>
      %cst_56 = arith.constant dense<0.000000e+00> : vector<1xf32>
      %66 = vector.multi_reduction <add>, %65, %cst_56 [1, 2] : vector<1x128x128xf32> to vector<1xf32>
      %67 = vector.shape_cast %66 : vector<1xf32> to vector<1x1x1xf32>
      %68 = vector.extract %67[0, 0, 0] : f32 from vector<1x1x1xf32>
      %69 = vector.broadcast %68 : f32 to vector<1x1xf32>
      %70 = math.sqrt %69 : vector<1x1xf32>
      %71 = vector.broadcast %56 : f32 to vector<1x1xf32>
      %72 = arith.addf %70, %71 : vector<1x1xf32>
      %73 = arith.mulf %55, %55 : vector<128x128xf32>
      %74 = vector.shape_cast %73 : vector<128x128xf32> to vector<1x128x128xf32>
      %cst_57 = arith.constant dense<0.000000e+00> : vector<1xf32>
      %75 = vector.multi_reduction <add>, %74, %cst_57 [1, 2] : vector<1x128x128xf32> to vector<1xf32>
      %76 = vector.shape_cast %75 : vector<1xf32> to vector<1x1x1xf32>
      %77 = vector.extract %76[0, 0, 0] : f32 from vector<1x1x1xf32>
      %78 = vector.broadcast %77 : f32 to vector<1x1xf32>
      %79 = math.sqrt %78 : vector<1x1xf32>
      %80 = vector.broadcast %56 : f32 to vector<1x1xf32>
      %81 = arith.addf %79, %80 : vector<1x1xf32>
      %82 = arith.mulf %72, %81 : vector<1x1xf32>
      %83 = math.sqrt %82 : vector<1x1xf32>
      %84 = arith.divf %63, %83 : vector<1x1xf32>
      %cst_58 = arith.constant 1.000000e+00 : f32
      %85 = vector.broadcast %cst_58 : f32 to vector<1x1xf32>
      %86 = arith.subf %85, %84 : vector<1x1xf32>
      %c0_59 = arith.constant 0 : index
      %c0_60 = arith.constant 0 : index
      %87 = vector.load %arg5[%c0_59, %c0_60] : memref<1x1xf32, #tpu.memory_space<vmem>>, vector<1x1xf32>
      tpu.vector_store %arg5[%c0_59, %c0_60], %86 {strides = array<i32>} : memref<1x1xf32, #tpu.memory_space<vmem>>, vector<1x1xf32>,
    } else {
    }
    return
  }
  func.func @transform_0(%arg0: i32) -> (i32, i32) {
    %c0_i32 = arith.constant 0 : i32
    %c0_i32_0 = arith.constant 0 : i32
    %c0_i32_1 = arith.constant 0 : i32
    return %c0_i32, %c0_i32_0 : i32, i32
  }
  func.func @transform_1(%arg0: i32) -> (i32, i32) {
    %c0_i32 = arith.constant 0 : i32
    %c0_i32_0 = arith.constant 0 : i32
    %c0_i32_1 = arith.constant 0 : i32
    return %c0_i32, %c0_i32_0 : i32, i32
  }
  func.func @transform_2(%arg0: i32) -> (i32, i32) {
    %c0_i32 = arith.constant 0 : i32
    %c0_i32_0 = arith.constant 0 : i32
    return %arg0, %c0_i32 : i32, i32
  }
  func.func @transform_3(%arg0: i32) -> (i32, i32) {
    %c0_i32 = arith.constant 0 : i32
    %c0_i32_0 = arith.constant 0 : i32
    return %arg0, %c0_i32 : i32, i32
  }
  func.func @transform_4(%arg0: i32) -> (i32, i32) {
    %c0_i32 = arith.constant 0 : i32
    %c0_i32_0 = arith.constant 0 : i32
    %c0_i32_1 = arith.constant 0 : i32
    return %c0_i32, %c0_i32_0 : i32, i32
  }
}

</mosaic_0001>

<llo_original>
// kernel: tpu_custom_call.1
$region0: #{tpu_custom_call.1}
  #allocation0 [shape = 'u32[]', space=smem, size = 0x4, offset = 0x4, fixed_abs, tag = 'smem constant byte address 0x4 - core index']
  #allocation1 [shape = 'u32[144,128]{1,0:T(1,128)}', space=vmem, size = 0x12000, scoped, tag = 'internal scratch']
  #allocation2 [shape = 'f32[128,128]{1,0:T(8,128)}', space=vmem, size = 0x10000, scoped, tag = 'scratch operand']
  #allocation3 [shape = 'f32[128,128]{1,0:T(8,128)}', space=vmem, size = 0x10000, scoped, tag = 'scratch operand']
  #allocation4 [shape = 'f32[128,128]{1,0:T(8,128)}', space=vmem, size = 0x10000, scoped, tag = 'scratch operand']
  #allocation5 [shape = 'f32[1,128]{1,0:T(1,128)}', space=vmem, size = 0x200, scoped, tag = 'scratch operand']
  #allocation6 [shape = 'f32[1,128]{1,0:T(1,128)}', space=vmem, size = 0x200, scoped, tag = 'scratch operand']
  %s0 = inlined_call_operand.hbm [shape: f32[1,128], index: 0, kind: input, shape index: {}]
  %s1 = inlined_call_operand.vmem [shape: f32[1,128], index: 1, kind: input, shape index: {}]
  %s2 = inlined_call_operand.hbm [shape: f32[16,128], index: 2, kind: input, shape index: {}]
  %s3 = inlined_call_operand.hbm [shape: f32[16,128], index: 3, kind: input, shape index: {}]
  %s4 = inlined_call_operand.hbm [shape: f32[1,1], index: 4, kind: output, shape index: {}]
  %s5 = sld [smem:[#allocation0]]
  $region46: #{tpu_custom_call.1} parent=0
    _
  %s7 = ssub.s32 1, %s5
  %s8 = scalar_select 0, %s7, %s5
  $region1: #{tpu_custom_call.1} parent=0
    #allocation7 [shape = 'u8[512]{0}', space=vmem, size = 0x400, scoped, tag = 'input window, operand 0, single buffered']
    #allocation8 [shape = 's32[1]{0}', space=sflag, size = 0x4, scoped, tag = 'scoped memory for tpu_custom_call.1']
    #allocation9 [shape = 's32[1]{0}', space=sflag, size = 0x4, scoped, tag = 'scoped memory for tpu_custom_call.1']
    #allocation10 [shape = 'u8[8192]{0}', space=vmem, size = 0x2000, scoped, tag = 'input window, operand 2, single buffered']
    #allocation11 [shape = 's32[1]{0}', space=sflag, size = 0x4, scoped, tag = 'scoped memory for tpu_custom_call.1']
    #allocation12 [shape = 'u8[8192]{0}', space=vmem, size = 0x2000, scoped, tag = 'input window, operand 3, single buffered']
    #allocation13 [shape = 'u8[512]{0}', space=vmem, size = 0x400, scoped, tag = 'output window, operand 0, single buffered']
    %9 = vsyncpa [#allocation8], 0
    %10 = vsyncpa [#allocation11], 0
    %11 = vsyncpa [#allocation9], 0
    // Predicated region
    $region2: #{tpu_custom_call.1} parent=1 // pred_check
      _
    $region3: #{tpu_custom_call.1} parent=1 // pred_check_branch
      %13 = sbr.rel (0) target = $region5
    $region4: #{tpu_custom_call.1} parent=1 // pred_region
      %s15 = ssub.s32 16, 16
      %16 = vsyncadd [#allocation8], %s15
      %s18 = sshll.u32 [#allocation7], 4
      %s19 = int_to_ptr.vmem [resolvable:$true] %s18
      %21 = dma.hbm_to_vmem [thread:$0]  %s0, 16, %s19, [#allocation8]
    $region5: #{tpu_custom_call.1} parent=1 // pred_fallthru
      _
    // Predicated region
    $region6: #{tpu_custom_call.1} parent=1 // pred_check
      _
    $region7: #{tpu_custom_call.1} parent=1 // pred_check_branch
      %23 = sbr.rel (0) target = $region9
    $region8: #{tpu_custom_call.1} parent=1 // pred_region
      _
    $region9: #{tpu_custom_call.1} parent=1 // pred_fallthru
      _
    // Predicated region
    $region10: #{tpu_custom_call.1} parent=1 // pred_check
      _
    $region11: #{tpu_custom_call.1} parent=1 // pred_check_branch
      %25 = sbr.rel (0) target = $region13
    $region12: #{tpu_custom_call.1} parent=1 // pred_region
      %s27 = ssub.s32 256, 256
      %28 = vsyncadd [#allocation11], %s27
      %s29 = sshll.u32 [#allocation10], 4
      %s30 = int_to_ptr.vmem [resolvable:$true] %s29
      %35 = dma.hbm_to_vmem [thread:$0]  %s2, 256, %s30, [#allocation11], 128, 128, 8
    $region13: #{tpu_custom_call.1} parent=1 // pred_fallthru
      _
    // Predicated region
    $region14: #{tpu_custom_call.1} parent=1 // pred_check
      _
    $region15: #{tpu_custom_call.1} parent=1 // pred_check_branch
      %37 = sbr.rel (0) target = $region17
    $region16: #{tpu_custom_call.1} parent=1 // pred_region
      %s39 = ssub.s32 256, 256
      %40 = vsyncadd [#allocation11], %s39
      %s41 = sshll.u32 [#allocation12], 4
      %s42 = int_to_ptr.vmem [resolvable:$true] %s41
      %47 = dma.hbm_to_vmem [thread:$0]  %s3, 256, %s42, [#allocation11], 128, 128, 8
    $region17: #{tpu_custom_call.1} parent=1 // pred_fallthru
      _
    // Predicated region
    $region18: #{tpu_custom_call.1} parent=1 // pred_check
      _
    $region19: #{tpu_custom_call.1} parent=1 // pred_check_branch
      %49 = sbr.rel (0) target = $region21
    $region20: #{tpu_custom_call.1} parent=1 // pred_region
      %50 = dma.done [#allocation8], 16
    $region21: #{tpu_custom_call.1} parent=1 // pred_fallthru
      _
    // Predicated region
    $region22: #{tpu_custom_call.1} parent=1 // pred_check
      _
    $region23: #{tpu_custom_call.1} parent=1 // pred_check_branch
      %52 = sbr.rel (0) target = $region25
    $region24: #{tpu_custom_call.1} parent=1 // pred_region
      %53 = dma.done [#allocation11], 256
    $region25: #{tpu_custom_call.1} parent=1 // pred_fallthru
      _
    // Predicated region
    $region26: #{tpu_custom_call.1} parent=1 // pred_check
      _
    $region27: #{tpu_custom_call.1} parent=1 // pred_check_branch
      %55 = sbr.rel (0) target = $region29
    $region28: #{tpu_custom_call.1} parent=1 // pred_region
      %56 = dma.done [#allocation11], 256
    $region29: #{tpu_custom_call.1} parent=1 // pred_fallthru
      _
    %p57 = scmp.eq.s32.totalorder 0, 0
    // Predicated region
    $region30: #{tpu_custom_call.1} parent=1 // pred_check
      %p58 = pneg %p57
    $region31: #{tpu_custom_call.1} parent=1 // pred_check_branch
      %60 = sbr.rel (%p58) target = $region33
    $region32: #{tpu_custom_call.1} parent=1 // pred_region
      %61 = vst [vmem:[#allocation2] sm:$0xff] 0.0
      %62 = vst [vmem:[#allocation2 + $0x8] sm:$0xff] 0.0
      %63 = vst [vmem:[#allocation2 + $0x10] sm:$0xff] 0.0
      %64 = vst [vmem:[#allocation2 + $0x18] sm:$0xff] 0.0
      %65 = vst [vmem:[#allocation2 + $0x20] sm:$0xff] 0.0
      %66 = vst [vmem:[#allocation2 + $0x28] sm:$0xff] 0.0
      %67 = vst [vmem:[#allocation2 + $0x30] sm:$0xff] 0.0
      %68 = vst [vmem:[#allocation2 + $0x38] sm:$0xff] 0.0
      %69 = vst [vmem:[#allocation2 + $0x40] sm:$0xff] 0.0
      %70 = vst [vmem:[#allocation2 + $0x48] sm:$0xff] 0.0
      %71 = vst [vmem:[#allocation2 + $0x50] sm:$0xff] 0.0
      %72 = vst [vmem:[#allocation2 + $0x58] sm:$0xff] 0.0
      %73 = vst [vmem:[#allocation2 + $0x60] sm:$0xff] 0.0
      %74 = vst [vmem:[#allocation2 + $0x68] sm:$0xff] 0.0
      %75 = vst [vmem:[#allocation2 + $0x70] sm:$0xff] 0.0
      %76 = vst [vmem:[#allocation2 + $0x78] sm:$0xff] 0.0
      %77 = vst [vmem:[#allocation3] sm:$0xff] 0.0
      %78 = vst [vmem:[#allocation3 + $0x8] sm:$0xff] 0.0
      %79 = vst [vmem:[#allocation3 + $0x10] sm:$0xff] 0.0
      %80 = vst [vmem:[#allocation3 + $0x18] sm:$0xff] 0.0
      %81 = vst [vmem:[#allocation3 + $0x20] sm:$0xff] 0.0
      %82 = vst [vmem:[#allocation3 + $0x28] sm:$0xff] 0.0
      %83 = vst [vmem:[#allocation3 + $0x30] sm:$0xff] 0.0
      %84 = vst [vmem:[#allocation3 + $0x38] sm:$0xff] 0.0
      %85 = vst [vmem:[#allocation3 + $0x40] sm:$0xff] 0.0
      %86 = vst [vmem:[#allocation3 + $0x48] sm:$0xff] 0.0
      %87 = vst [vmem:[#allocation3 + $0x50] sm:$0xff] 0.0
      %88 = vst [vmem:[#allocation3 + $0x58] sm:$0xff] 0.0
      %89 = vst [vmem:[#allocation3 + $0x60] sm:$0xff] 0.0
      %90 = vst [vmem:[#allocation3 + $0x68] sm:$0xff] 0.0
      %91 = vst [vmem:[#allocation3 + $0x70] sm:$0xff] 0.0
      %92 = vst [vmem:[#allocation3 + $0x78] sm:$0xff] 0.0
      %93 = vst [vmem:[#allocation4] sm:$0xff] 0.0
      %94 = vst [vmem:[#allocation4 + $0x8] sm:$0xff] 0.0
      %95 = vst [vmem:[#allocation4 + $0x10] sm:$0xff] 0.0
      %96 = vst [vmem:[#allocation4 + $0x18] sm:$0xff] 0.0
      %97 = vst [vmem:[#allocation4 + $0x20] sm:$0xff] 0.0
      %98 = vst [vmem:[#allocation4 + $0x28] sm:$0xff] 0.0
      %99 = vst [vmem:[#allocation4 + $0x30] sm:$0xff] 0.0
      %100 = vst [vmem:[#allocation4 + $0x38] sm:$0xff] 0.0
      %101 = vst [vmem:[#allocation4 + $0x40] sm:$0xff] 0.0
      %102 = vst [vmem:[#allocation4 + $0x48] sm:$0xff] 0.0
      %103 = vst [vmem:[#allocation4 + $0x50] sm:$0xff] 0.0
      %104 = vst [vmem:[#allocation4 + $0x58] sm:$0xff] 0.0
      %105 = vst [vmem:[#allocation4 + $0x60] sm:$0xff] 0.0
      %106 = vst [vmem:[#allocation4 + $0x68] sm:$0xff] 0.0
      %107 = vst [vmem:[#allocation4 + $0x70] sm:$0xff] 0.0
      %108 = vst [vmem:[#allocation4 + $0x78] sm:$0xff] 0.0
      %109 = vst [vmem:[#allocation5] sm:$0x1] 0.0
      %110 = vst [vmem:[#allocation6] sm:$0x1] 0.0
    $region33: #{tpu_custom_call.1} parent=1 // pred_fallthru
      _
    %v111 = vld [vmem:[#allocation10] sm:$0xff]
    %v112 = vld [vmem:[#allocation10 + $0x8] sm:$0xff]
    %v113 = vld [vmem:[#allocation7] sm:$0x1]
    %v115 = vlaneseq
    %v116 = vshrl.u32 %v115, 7
    %v117 = vsub.s32 0, %v116
    %v118 = vrot.slane %v113, %v117
    %v120 = vsub.f32 %v111, %v118
    %v121 = vsub.f32 %v112, %v118
    %v122 = vld [vmem:[#allocation12] sm:$0xff]
    %v123 = vld [vmem:[#allocation12 + $0x8] sm:$0xff]
    %v124 = vld [vmem:[%s1] sm:$0x1]
    %v126 = vlaneseq
    %v127 = vshrl.u32 %v126, 7
    %v128 = vsub.s32 0, %v127
    %v129 = vrot.slane %v124, %v128
    %v131 = vsub.f32 %v122, %v129
    %v132 = vsub.f32 %v123, %v129
    %v133 = vld [vmem:[#allocation2] sm:$0xff]
    %v134 = vld [vmem:[#allocation2 + $0x8] sm:$0xff]
    %v135 = vld [vmem:[#allocation2 + $0x10] sm:$0xff]
    %v136 = vld [vmem:[#allocation2 + $0x18] sm:$0xff]
    %v137 = vld [vmem:[#allocation2 + $0x20] sm:$0xff]
    %v138 = vld [vmem:[#allocation2 + $0x28] sm:$0xff]
    %v139 = vld [vmem:[#allocation2 + $0x30] sm:$0xff]
    %v140 = vld [vmem:[#allocation2 + $0x38] sm:$0xff]
    %v141 = vld [vmem:[#allocation2 + $0x40] sm:$0xff]
    %v142 = vld [vmem:[#allocation2 + $0x48] sm:$0xff]
    %v143 = vld [vmem:[#allocation2 + $0x50] sm:$0xff]
    %v144 = vld [vmem:[#allocation2 + $0x58] sm:$0xff]
    %v145 = vld [vmem:[#allocation2 + $0x60] sm:$0xff]
    %v146 = vld [vmem:[#allocation2 + $0x68] sm:$0xff]
    %v147 = vld [vmem:[#allocation2 + $0x70] sm:$0xff]
    %v148 = vld [vmem:[#allocation2 + $0x78] sm:$0xff]
    %149 = vxpose.xlu0.b32.start [1/16] %v120, 128
    %150 = vxpose.xlu0.b32.cont [2/16] %v121, 128
    %151 = vxpose.xlu0.b32.cont [3/16] 0.0, 128
    %152 = vxpose.xlu0.b32.cont [4/16] 0.0, 128
    %153 = vxpose.xlu0.b32.cont [5/16] 0.0, 128
    %154 = vxpose.xlu0.b32.cont [6/16] 0.0, 128
    %155 = vxpose.xlu0.b32.cont [7/16] 0.0, 128
    %156 = vxpose.xlu0.b32.cont [8/16] 0.0, 128
    %157 = vxpose.xlu0.b32.cont [9/16] 0.0, 128
    %158 = vxpose.xlu0.b32.cont [10/16] 0.0, 128
    %159 = vxpose.xlu0.b32.cont [11/16] 0.0, 128
    %160 = vxpose.xlu0.b32.cont [12/16] 0.0, 128
    %161 = vxpose.xlu0.b32.cont [13/16] 0.0, 128
    %162 = vxpose.xlu0.b32.cont [14/16] 0.0, 128
    %163 = vxpose.xlu0.b32.cont [15/16] 0.0, 128
    %164 = vxpose.xlu0.b32.end [16/16] 0.0, 128
    %v165 = vpop.trf.xlu0
    %v166 = vpop.trf.xlu0
    %v167 = vpop.trf.xlu0
    %v168 = vpop.trf.xlu0
    %v169 = vpop.trf.xlu0
    %v170 = vpop.trf.xlu0
    %v171 = vpop.trf.xlu0
    %v172 = vpop.trf.xlu0
    %v173 = vpop.trf.xlu0
    %v174 = vpop.trf.xlu0
    %v175 = vpop.trf.xlu0
    %v176 = vpop.trf.xlu0
    %v177 = vpop.trf.xlu0
    %v178 = vpop.trf.xlu0
    %v179 = vpop.trf.xlu0
    %v180 = vpop.trf.xlu0
    %vm181 = vcmask 130048
    %v183 = vsel %vm181, %v165, 0
    %v186 = vsel %vm181, %v166, 0
    %v189 = vsel %vm181, %v167, 0
    %v192 = vsel %vm181, %v168, 0
    %v195 = vsel %vm181, %v169, 0
    %v198 = vsel %vm181, %v170, 0
    %v201 = vsel %vm181, %v171, 0
    %v204 = vsel %vm181, %v172, 0
    %v207 = vsel %vm181, %v173, 0
    %v210 = vsel %vm181, %v174, 0
    %v213 = vsel %vm181, %v175, 0
    %v216 = vsel %vm181, %v176, 0
    %v219 = vsel %vm181, %v177, 0
    %v222 = vsel %vm181, %v178, 0
    %v225 = vsel %vm181, %v179, 0
    %v228 = vsel %vm181, %v180, 0
    %230 = vmatprep.subr.mxu0 0.0
    %231 = vmatpush1.msra.mxu0 0.0
    %232 = vmatprep.subr.mxu0 0.0
    %233 = vmatpush1.msra.mxu0 0.0
    %234 = vmatprep.subr.mxu0 0.0
    %235 = vmatpush1.msra.mxu0 0.0
    %236 = vmatprep.subr.mxu0 0.0
    %237 = vmatpush1.msra.mxu0 0.0
    %238 = vmatprep.subr.mxu0 0.0
    %239 = vmatpush1.msra.mxu0 0.0
    %240 = vmatprep.subr.mxu0 0.0
    %241 = vmatpush1.msra.mxu0 0.0
    %242 = vmatprep.subr.mxu0 0.0
    %243 = vmatpush1.msra.mxu0 0.0
    %244 = vmatprep.subr.mxu0 0.0
    %245 = vmatpush1.msra.mxu0 0.0
    %246 = vmatprep.subr.mxu0 0.0
    %247 = vmatpush1.msra.mxu0 0.0
    %248 = vmatprep.subr.mxu0 0.0
    %249 = vmatpush1.msra.mxu0 0.0
    %250 = vmatprep.subr.mxu0 0.0
    %251 = vmatpush1.msra.mxu0 0.0
    %252 = vmatprep.subr.mxu0 0.0
    %253 = vmatpush1.msra.mxu0 0.0
    %254 = vmatprep.subr.mxu0 0.0
    %255 = vmatpush1.msra.mxu0 0.0
    %256 = vmatprep.subr.mxu0 0.0
    %257 = vmatpush1.msra.mxu0 0.0
    %258 = vmatprep.subr.mxu0 0.0
    %259 = vmatpush1.msra.mxu0 %v132
    %260 = vmatprep.subr.mxu0 0.0
    %261 = vmatpush1.msra.mxu0 %v131
    %262 = vmatprep.subr.mxu0 0.0
    %263 = vmatpush2.msra.mxu0 0.0
    %264 = vmatprep.subr.mxu0 0.0
    %265 = vmatpush2.msra.mxu0 0.0
    %266 = vmatprep.subr.mxu0 0.0
    %267 = vmatpush2.msra.mxu0 0.0
    %268 = vmatprep.subr.mxu0 0.0
    %269 = vmatpush2.msra.mxu0 0.0
    %270 = vmatprep.subr.mxu0 0.0
    %271 = vmatpush2.msra.mxu0 0.0
    %272 = vmatprep.subr.mxu0 0.0
    %273 = vmatpush2.msra.mxu0 0.0
    %274 = vmatprep.subr.mxu0 0.0
    %275 = vmatpush2.msra.mxu0 0.0
    %276 = vmatprep.subr.mxu0 0.0
    %277 = vmatpush2.msra.mxu0 0.0
    %278 = vmatprep.subr.mxu0 0.0
    %279 = vmatpush2.msra.mxu0 0.0
    %280 = vmatprep.subr.mxu0 0.0
    %281 = vmatpush2.msra.mxu0 0.0
    %282 = vmatprep.subr.mxu0 0.0
    %283 = vmatpush2.msra.mxu0 0.0
    %284 = vmatprep.subr.mxu0 0.0
    %285 = vmatpush2.msra.mxu0 0.0
    %286 = vmatprep.subr.mxu0 0.0
    %287 = vmatpush2.msra.mxu0 0.0
    %288 = vmatprep.subr.mxu0 0.0
    %289 = vmatpush2.msra.mxu0 0.0
    %290 = vmatprep.subr.mxu0 0.0
    %291 = vmatpush2.msra.mxu0 0.0
    %292 = vmatprep.subr.mxu0 0.0
    %293 = vmatpush2.msra.mxu0 0.0
    %294 = vmatprep.mubr.f32.mxu0 0.0
    %295 = vmatmul.mubr.f32.gmra.mxu0 %v183
    %v296 = vpop.f32.mrf.mxu0
    %v297 = vadd.f32 0.0, %v296
    %v298 = vpop.f32.mrf.mxu0
    %299 = vmatprep.mubr.f32.mxu0 0.0
    %300 = vmatmul.mubr.f32.gmra.mxu0 %v186
    %v301 = vpop.f32.mrf.mxu0
    %v302 = vadd.f32 0.0, %v301
    %v303 = vpop.f32.mrf.mxu0
    %304 = vmatprep.mubr.f32.mxu0 0.0
    %305 = vmatmul.mubr.f32.gmra.mxu0 %v189
    %v306 = vpop.f32.mrf.mxu0
    %v307 = vadd.f32 0.0, %v306
    %v308 = vpop.f32.mrf.mxu0
    %309 = vmatprep.mubr.f32.mxu0 0.0
    %310 = vmatmul.mubr.f32.gmra.mxu0 %v192
    %v311 = vpop.f32.mrf.mxu0
    %v312 = vadd.f32 0.0, %v311
    %v313 = vpop.f32.mrf.mxu0
    %314 = vmatprep.mubr.f32.mxu0 0.0
    %315 = vmatmul.mubr.f32.gmra.mxu0 %v195
    %v316 = vpop.f32.mrf.mxu0
    %v317 = vadd.f32 0.0, %v316
    %v318 = vpop.f32.mrf.mxu0
    %319 = vmatprep.mubr.f32.mxu0 0.0
    %320 = vmatmul.mubr.f32.gmra.mxu0 %v198
    %v321 = vpop.f32.mrf.mxu0
    %v322 = vadd.f32 0.0, %v321
    %v323 = vpop.f32.mrf.mxu0
    %324 = vmatprep.mubr.f32.mxu0 0.0
    %325 = vmatmul.mubr.f32.gmra.mxu0 %v201
    %v326 = vpop.f32.mrf.mxu0
    %v327 = vadd.f32 0.0, %v326
    %v328 = vpop.f32.mrf.mxu0
    %329 = vmatprep.mubr.f32.mxu0 0.0
    %330 = vmatmul.mubr.f32.gmra.mxu0 %v204
    %v331 = vpop.f32.mrf.mxu0
    %v332 = vadd.f32 0.0, %v331
    %v333 = vpop.f32.mrf.mxu0
    %334 = vmatprep.mubr.f32.mxu0 0.0
    %335 = vmatmul.mubr.f32.gmra.mxu0 %v207
    %v336 = vpop.f32.mrf.mxu0
    %v337 = vadd.f32 0.0, %v336
    %v338 = vpop.f32.mrf.mxu0
    %339 = vmatprep.mubr.f32.mxu0 0.0
    %340 = vmatmul.mubr.f32.gmra.mxu0 %v210
    %v341 = vpop.f32.mrf.mxu0
    %v342 = vadd.f32 0.0, %v341
    %v343 = vpop.f32.mrf.mxu0
    %344 = vmatprep.mubr.f32.mxu0 0.0
    %345 = vmatmul.mubr.f32.gmra.mxu0 %v213
    %v346 = vpop.f32.mrf.mxu0
    %v347 = vadd.f32 0.0, %v346
    %v348 = vpop.f32.mrf.mxu0
    %349 = vmatprep.mubr.f32.mxu0 0.0
    %350 = vmatmul.mubr.f32.gmra.mxu0 %v216
    %v351 = vpop.f32.mrf.mxu0
    %v352 = vadd.f32 0.0, %v351
    %v353 = vpop.f32.mrf.mxu0
    %354 = vmatprep.mubr.f32.mxu0 0.0
    %355 = vmatmul.mubr.f32.gmra.mxu0 %v219
    %v356 = vpop.f32.mrf.mxu0
    %v357 = vadd.f32 0.0, %v356
    %v358 = vpop.f32.mrf.mxu0
    %359 = vmatprep.mubr.f32.mxu0 0.0
    %360 = vmatmul.mubr.f32.gmra.mxu0 %v222
    %v361 = vpop.f32.mrf.mxu0
    %v362 = vadd.f32 0.0, %v361
    %v363 = vpop.f32.mrf.mxu0
    %364 = vmatprep.mubr.f32.mxu0 0.0
    %365 = vmatmul.mubr.f32.gmra.mxu0 %v225
    %v366 = vpop.f32.mrf.mxu0
    %v367 = vadd.f32 0.0, %v366
    %v368 = vpop.f32.mrf.mxu0
    %369 = vmatprep.mubr.f32.mxu0 0.0
    %370 = vmatmul.mubr.f32.gmra.mxu0 %v228
    %v371 = vpop.f32.mrf.mxu0
    %v372 = vadd.f32 0.0, %v371
    %v373 = vpop.f32.mrf.mxu0
    %374 = vdwg.mxu0
    %v375 = vadd.f32 %v133, %v297
    %v376 = vadd.f32 %v134, %v302
    %v377 = vadd.f32 %v135, %v307
    %v378 = vadd.f32 %v136, %v312
    %v379 = vadd.f32 %v137, %v317
    %v380 = vadd.f32 %v138, %v322
    %v381 = vadd.f32 %v139, %v327
    %v382 = vadd.f32 %v140, %v332
    %v383 = vadd.f32 %v141, %v337
    %v384 = vadd.f32 %v142, %v342
    %v385 = vadd.f32 %v143, %v347
    %v386 = vadd.f32 %v144, %v352
    %v387 = vadd.f32 %v145, %v357
    %v388 = vadd.f32 %v146, %v362
    %v389 = vadd.f32 %v147, %v367
    %v390 = vadd.f32 %v148, %v372
    %391 = vst [vmem:[#allocation2] sm:$0xff] %v375
    %392 = vst [vmem:[#allocation2 + $0x8] sm:$0xff] %v376
    %393 = vst [vmem:[#allocation2 + $0x10] sm:$0xff] %v377
    %394 = vst [vmem:[#allocation2 + $0x18] sm:$0xff] %v378
    %395 = vst [vmem:[#allocation2 + $0x20] sm:$0xff] %v379
    %396 = vst [vmem:[#allocation2 + $0x28] sm:$0xff] %v380
    %397 = vst [vmem:[#allocation2 + $0x30] sm:$0xff] %v381
    %398 = vst [vmem:[#allocation2 + $0x38] sm:$0xff] %v382
    %399 = vst [vmem:[#allocation2 + $0x40] sm:$0xff] %v383
    %400 = vst [vmem:[#allocation2 + $0x48] sm:$0xff] %v384
    %401 = vst [vmem:[#allocation2 + $0x50] sm:$0xff] %v385
    %402 = vst [vmem:[#allocation2 + $0x58] sm:$0xff] %v386
    %403 = vst [vmem:[#allocation2 + $0x60] sm:$0xff] %v387
    %404 = vst [vmem:[#allocation2 + $0x68] sm:$0xff] %v388
    %405 = vst [vmem:[#allocation2 + $0x70] sm:$0xff] %v389
    %406 = vst [vmem:[#allocation2 + $0x78] sm:$0xff] %v390
    %v407 = vld [vmem:[#allocation3] sm:$0xff]
    %v408 = vld [vmem:[#allocation3 + $0x8] sm:$0xff]
    %v409 = vld [vmem:[#allocation3 + $0x10] sm:$0xff]
    %v410 = vld [vmem:[#allocation3 + $0x18] sm:$0xff]
    %v411 = vld [vmem:[#allocation3 + $0x20] sm:$0xff]
    %v412 = vld [vmem:[#allocation3 + $0x28] sm:$0xff]
    %v413 = vld [vmem:[#allocation3 + $0x30] sm:$0xff]
    %v414 = vld [vmem:[#allocation3 + $0x38] sm:$0xff]
    %v415 = vld [vmem:[#allocation3 + $0x40] sm:$0xff]
    %v416 = vld [vmem:[#allocation3 + $0x48] sm:$0xff]
    %v417 = vld [vmem:[#allocation3 + $0x50] sm:$0xff]
    %v418 = vld [vmem:[#allocation3 + $0x58] sm:$0xff]
    %v419 = vld [vmem:[#allocation3 + $0x60] sm:$0xff]
    %v420 = vld [vmem:[#allocation3 + $0x68] sm:$0xff]
    %v421 = vld [vmem:[#allocation3 + $0x70] sm:$0xff]
    %v422 = vld [vmem:[#allocation3 + $0x78] sm:$0xff]
    %423 = vmatprep.subr.mxu0 0.0
    %424 = vmatpush1.msra.mxu0 0.0
    %425 = vmatprep.subr.mxu0 0.0
    %426 = vmatpush1.msra.mxu0 0.0
    %427 = vmatprep.subr.mxu0 0.0
    %428 = vmatpush1.msra.mxu0 0.0
    %429 = vmatprep.subr.mxu0 0.0
    %430 = vmatpush1.msra.mxu0 0.0
    %431 = vmatprep.subr.mxu0 0.0
    %432 = vmatpush1.msra.mxu0 0.0
    %433 = vmatprep.subr.mxu0 0.0
    %434 = vmatpush1.msra.mxu0 0.0
    %435 = vmatprep.subr.mxu0 0.0
    %436 = vmatpush1.msra.mxu0 0.0
    %437 = vmatprep.subr.mxu0 0.0
    %438 = vmatpush1.msra.mxu0 0.0
    %439 = vmatprep.subr.mxu0 0.0
    %440 = vmatpush1.msra.mxu0 0.0
    %441 = vmatprep.subr.mxu0 0.0
    %442 = vmatpush1.msra.mxu0 0.0
    %443 = vmatprep.subr.mxu0 0.0
    %444 = vmatpush1.msra.mxu0 0.0
    %445 = vmatprep.subr.mxu0 0.0
    %446 = vmatpush1.msra.mxu0 0.0
    %447 = vmatprep.subr.mxu0 0.0
    %448 = vmatpush1.msra.mxu0 0.0
    %449 = vmatprep.subr.mxu0 0.0
    %450 = vmatpush1.msra.mxu0 0.0
    %451 = vmatprep.subr.mxu0 0.0
    %452 = vmatpush1.msra.mxu0 %v121
    %453 = vmatprep.subr.mxu0 0.0
    %454 = vmatpush1.msra.mxu0 %v120
    %455 = vmatprep.subr.mxu0 0.0
    %456 = vmatpush2.msra.mxu0 0.0
    %457 = vmatprep.subr.mxu0 0.0
    %458 = vmatpush2.msra.mxu0 0.0
    %459 = vmatprep.subr.mxu0 0.0
    %460 = vmatpush2.msra.mxu0 0.0
    %461 = vmatprep.subr.mxu0 0.0
    %462 = vmatpush2.msra.mxu0 0.0
    %463 = vmatprep.subr.mxu0 0.0
    %464 = vmatpush2.msra.mxu0 0.0
    %465 = vmatprep.subr.mxu0 0.0
    %466 = vmatpush2.msra.mxu0 0.0
    %467 = vmatprep.subr.mxu0 0.0
    %468 = vmatpush2.msra.mxu0 0.0
    %469 = vmatprep.subr.mxu0 0.0
    %470 = vmatpush2.msra.mxu0 0.0
    %471 = vmatprep.subr.mxu0 0.0
    %472 = vmatpush2.msra.mxu0 0.0
    %473 = vmatprep.subr.mxu0 0.0
    %474 = vmatpush2.msra.mxu0 0.0
    %475 = vmatprep.subr.mxu0 0.0
    %476 = vmatpush2.msra.mxu0 0.0
    %477 = vmatprep.subr.mxu0 0.0
    %478 = vmatpush2.msra.mxu0 0.0
    %479 = vmatprep.subr.mxu0 0.0
    %480 = vmatpush2.msra.mxu0 0.0
    %481 = vmatprep.subr.mxu0 0.0
    %482 = vmatpush2.msra.mxu0 0.0
    %483 = vmatprep.subr.mxu0 0.0
    %484 = vmatpush2.msra.mxu0 0.0
    %485 = vmatprep.subr.mxu0 0.0
    %486 = vmatpush2.msra.mxu0 0.0
    %487 = vmatprep.mubr.f32.mxu0 0.0
    %488 = vmatmul.mubr.f32.gmra.mxu0 %v183
    %v489 = vpop.f32.mrf.mxu0
    %v490 = vadd.f32 0.0, %v489
    %v491 = vpop.f32.mrf.mxu0
    %492 = vmatprep.mubr.f32.mxu0 0.0
    %493 = vmatmul.mubr.f32.gmra.mxu0 %v186
    %v494 = vpop.f32.mrf.mxu0
    %v495 = vadd.f32 0.0, %v494
    %v496 = vpop.f32.mrf.mxu0
    %497 = vmatprep.mubr.f32.mxu0 0.0
    %498 = vmatmul.mubr.f32.gmra.mxu0 %v189
    %v499 = vpop.f32.mrf.mxu0
    %v500 = vadd.f32 0.0, %v499
    %v501 = vpop.f32.mrf.mxu0
    %502 = vmatprep.mubr.f32.mxu0 0.0
    %503 = vmatmul.mubr.f32.gmra.mxu0 %v192
    %v504 = vpop.f32.mrf.mxu0
    %v505 = vadd.f32 0.0, %v504
    %v506 = vpop.f32.mrf.mxu0
    %507 = vmatprep.mubr.f32.mxu0 0.0
    %508 = vmatmul.mubr.f32.gmra.mxu0 %v195
    %v509 = vpop.f32.mrf.mxu0
    %v510 = vadd.f32 0.0, %v509
    %v511 = vpop.f32.mrf.mxu0
    %512 = vmatprep.mubr.f32.mxu0 0.0
    %513 = vmatmul.mubr.f32.gmra.mxu0 %v198
    %v514 = vpop.f32.mrf.mxu0
    %v515 = vadd.f32 0.0, %v514
    %v516 = vpop.f32.mrf.mxu0
    %517 = vmatprep.mubr.f32.mxu0 0.0
    %518 = vmatmul.mubr.f32.gmra.mxu0 %v201
    %v519 = vpop.f32.mrf.mxu0
    %v520 = vadd.f32 0.0, %v519
    %v521 = vpop.f32.mrf.mxu0
    %522 = vmatprep.mubr.f32.mxu0 0.0
    %523 = vmatmul.mubr.f32.gmra.mxu0 %v204
    %v524 = vpop.f32.mrf.mxu0
    %v525 = vadd.f32 0.0, %v524
    %v526 = vpop.f32.mrf.mxu0
    %527 = vmatprep.mubr.f32.mxu0 0.0
    %528 = vmatmul.mubr.f32.gmra.mxu0 %v207
    %v529 = vpop.f32.mrf.mxu0
    %v530 = vadd.f32 0.0, %v529
    %v531 = vpop.f32.mrf.mxu0
    %532 = vmatprep.mubr.f32.mxu0 0.0
    %533 = vmatmul.mubr.f32.gmra.mxu0 %v210
    %v534 = vpop.f32.mrf.mxu0
    %v535 = vadd.f32 0.0, %v534
    %v536 = vpop.f32.mrf.mxu0
    %537 = vmatprep.mubr.f32.mxu0 0.0
    %538 = vmatmul.mubr.f32.gmra.mxu0 %v213
    %v539 = vpop.f32.mrf.mxu0
    %v540 = vadd.f32 0.0, %v539
    %v541 = vpop.f32.mrf.mxu0
    %542 = vmatprep.mubr.f32.mxu0 0.0
    %543 = vmatmul.mubr.f32.gmra.mxu0 %v216
    %v544 = vpop.f32.mrf.mxu0
    %v545 = vadd.f32 0.0, %v544
    %v546 = vpop.f32.mrf.mxu0
    %547 = vmatprep.mubr.f32.mxu0 0.0
    %548 = vmatmul.mubr.f32.gmra.mxu0 %v219
    %v549 = vpop.f32.mrf.mxu0
    %v550 = vadd.f32 0.0, %v549
    %v551 = vpop.f32.mrf.mxu0
    %552 = vmatprep.mubr.f32.mxu0 0.0
    %553 = vmatmul.mubr.f32.gmra.mxu0 %v222
    %v554 = vpop.f32.mrf.mxu0
    %v555 = vadd.f32 0.0, %v554
    %v556 = vpop.f32.mrf.mxu0
    %557 = vmatprep.mubr.f32.mxu0 0.0
    %558 = vmatmul.mubr.f32.gmra.mxu0 %v225
    %v559 = vpop.f32.mrf.mxu0
    %v560 = vadd.f32 0.0, %v559
    %v561 = vpop.f32.mrf.mxu0
    %562 = vmatprep.mubr.f32.mxu0 0.0
    %563 = vmatmul.mubr.f32.gmra.mxu0 %v228
    %v564 = vpop.f32.mrf.mxu0
    %v565 = vadd.f32 0.0, %v564
    %v566 = vpop.f32.mrf.mxu0
    %567 = vdwg.mxu0
    %v568 = vadd.f32 %v407, %v490
    %v569 = vadd.f32 %v408, %v495
    %v570 = vadd.f32 %v409, %v500
    %v571 = vadd.f32 %v410, %v505
    %v572 = vadd.f32 %v411, %v510
    %v573 = vadd.f32 %v412, %v515
    %v574 = vadd.f32 %v413, %v520
    %v575 = vadd.f32 %v414, %v525
    %v576 = vadd.f32 %v415, %v530
    %v577 = vadd.f32 %v416, %v535
    %v578 = vadd.f32 %v417, %v540
    %v579 = vadd.f32 %v418, %v545
    %v580 = vadd.f32 %v419, %v550
    %v581 = vadd.f32 %v420, %v555
    %v582 = vadd.f32 %v421, %v560
    %v583 = vadd.f32 %v422, %v565
    %584 = vst [vmem:[#allocation3] sm:$0xff] %v568
    %585 = vst [vmem:[#allocation3 + $0x8] sm:$0xff] %v569
    %586 = vst [vmem:[#allocation3 + $0x10] sm:$0xff] %v570
    %587 = vst [vmem:[#allocation3 + $0x18] sm:$0xff] %v571
    %588 = vst [vmem:[#allocation3 + $0x20] sm:$0xff] %v572
    %589 = vst [vmem:[#allocation3 + $0x28] sm:$0xff] %v573
    %590 = vst [vmem:[#allocation3 + $0x30] sm:$0xff] %v574
    %591 = vst [vmem:[#allocation3 + $0x38] sm:$0xff] %v575
    %592 = vst [vmem:[#allocation3 + $0x40] sm:$0xff] %v576
    %593 = vst [vmem:[#allocation3 + $0x48] sm:$0xff] %v577
    %594 = vst [vmem:[#allocation3 + $0x50] sm:$0xff] %v578
    %595 = vst [vmem:[#allocation3 + $0x58] sm:$0xff] %v579
    %596 = vst [vmem:[#allocation3 + $0x60] sm:$0xff] %v580
    %597 = vst [vmem:[#allocation3 + $0x68] sm:$0xff] %v581
    %598 = vst [vmem:[#allocation3 + $0x70] sm:$0xff] %v582
    %599 = vst [vmem:[#allocation3 + $0x78] sm:$0xff] %v583
    %v600 = vld [vmem:[#allocation4] sm:$0xff]
    %v601 = vld [vmem:[#allocation4 + $0x8] sm:$0xff]
    %v602 = vld [vmem:[#allocation4 + $0x10] sm:$0xff]
    %v603 = vld [vmem:[#allocation4 + $0x18] sm:$0xff]
    %v604 = vld [vmem:[#allocation4 + $0x20] sm:$0xff]
    %v605 = vld [vmem:[#allocation4 + $0x28] sm:$0xff]
    %v606 = vld [vmem:[#allocation4 + $0x30] sm:$0xff]
    %v607 = vld [vmem:[#allocation4 + $0x38] sm:$0xff]
    %v608 = vld [vmem:[#allocation4 + $0x40] sm:$0xff]
    %v609 = vld [vmem:[#allocation4 + $0x48] sm:$0xff]
    %v610 = vld [vmem:[#allocation4 + $0x50] sm:$0xff]
    %v611 = vld [vmem:[#allocation4 + $0x58] sm:$0xff]
    %v612 = vld [vmem:[#allocation4 + $0x60] sm:$0xff]
    %v613 = vld [vmem:[#allocation4 + $0x68] sm:$0xff]
    %v614 = vld [vmem:[#allocation4 + $0x70] sm:$0xff]
    %v615 = vld [vmem:[#allocation4 + $0x78] sm:$0xff]
    %616 = vxpose.xlu0.b32.start [1/16] %v131, 128
    %617 = vxpose.xlu0.b32.cont [2/16] %v132, 128
    %618 = vxpose.xlu0.b32.cont [3/16] 0.0, 128
    %619 = vxpose.xlu0.b32.cont [4/16] 0.0, 128
    %620 = vxpose.xlu0.b32.cont [5/16] 0.0, 128
    %621 = vxpose.xlu0.b32.cont [6/16] 0.0, 128
    %622 = vxpose.xlu0.b32.cont [7/16] 0.0, 128
    %623 = vxpose.xlu0.b32.cont [8/16] 0.0, 128
    %624 = vxpose.xlu0.b32.cont [9/16] 0.0, 128
    %625 = vxpose.xlu0.b32.cont [10/16] 0.0, 128
    %626 = vxpose.xlu0.b32.cont [11/16] 0.0, 128
    %627 = vxpose.xlu0.b32.cont [12/16] 0.0, 128
    %628 = vxpose.xlu0.b32.cont [13/16] 0.0, 128
    %629 = vxpose.xlu0.b32.cont [14/16] 0.0, 128
    %630 = vxpose.xlu0.b32.cont [15/16] 0.0, 128
    %631 = vxpose.xlu0.b32.end [16/16] 0.0, 128
    %v632 = vpop.trf.xlu0
    %v633 = vpop.trf.xlu0
    %v634 = vpop.trf.xlu0
    %v635 = vpop.trf.xlu0
    %v636 = vpop.trf.xlu0
    %v637 = vpop.trf.xlu0
    %v638 = vpop.trf.xlu0
    %v639 = vpop.trf.xlu0
    %v640 = vpop.trf.xlu0
    %v641 = vpop.trf.xlu0
    %v642 = vpop.trf.xlu0
    %v643 = vpop.trf.xlu0
    %v644 = vpop.trf.xlu0
    %v645 = vpop.trf.xlu0
    %v646 = vpop.trf.xlu0
    %v647 = vpop.trf.xlu0
    %v649 = vsel %vm181, %v632, 0
    %v652 = vsel %vm181, %v633, 0
    %v655 = vsel %vm181, %v634, 0
    %v658 = vsel %vm181, %v635, 0
    %v661 = vsel %vm181, %v636, 0
    %v664 = vsel %vm181, %v637, 0
    %v667 = vsel %vm181, %v638, 0
    %v670 = vsel %vm181, %v639, 0
    %v673 = vsel %vm181, %v640, 0
    %v676 = vsel %vm181, %v641, 0
    %v679 = vsel %vm181, %v642, 0
    %v682 = vsel %vm181, %v643, 0
    %v685 = vsel %vm181, %v644, 0
    %v688 = vsel %vm181, %v645, 0
    %v691 = vsel %vm181, %v646, 0
    %v694 = vsel %vm181, %v647, 0
    %696 = vmatprep.subr.mxu0 0.0
    %697 = vmatpush1.msra.mxu0 0.0
    %698 = vmatprep.subr.mxu0 0.0
    %699 = vmatpush1.msra.mxu0 0.0
    %700 = vmatprep.subr.mxu0 0.0
    %701 = vmatpush1.msra.mxu0 0.0
    %702 = vmatprep.subr.mxu0 0.0
    %703 = vmatpush1.msra.mxu0 0.0
    %704 = vmatprep.subr.mxu0 0.0
    %705 = vmatpush1.msra.mxu0 0.0
    %706 = vmatprep.subr.mxu0 0.0
    %707 = vmatpush1.msra.mxu0 0.0
    %708 = vmatprep.subr.mxu0 0.0
    %709 = vmatpush1.msra.mxu0 0.0
    %710 = vmatprep.subr.mxu0 0.0
    %711 = vmatpush1.msra.mxu0 0.0
    %712 = vmatprep.subr.mxu0 0.0
    %713 = vmatpush1.msra.mxu0 0.0
    %714 = vmatprep.subr.mxu0 0.0
    %715 = vmatpush1.msra.mxu0 0.0
    %716 = vmatprep.subr.mxu0 0.0
    %717 = vmatpush1.msra.mxu0 0.0
    %718 = vmatprep.subr.mxu0 0.0
    %719 = vmatpush1.msra.mxu0 0.0
    %720 = vmatprep.subr.mxu0 0.0
    %721 = vmatpush1.msra.mxu0 0.0
    %722 = vmatprep.subr.mxu0 0.0
    %723 = vmatpush1.msra.mxu0 0.0
    %724 = vmatprep.subr.mxu0 0.0
    %725 = vmatpush1.msra.mxu0 %v132
    %726 = vmatprep.subr.mxu0 0.0
    %727 = vmatpush1.msra.mxu0 %v131
    %728 = vmatprep.subr.mxu0 0.0
    %729 = vmatpush2.msra.mxu0 0.0
    %730 = vmatprep.subr.mxu0 0.0
    %731 = vmatpush2.msra.mxu0 0.0
    %732 = vmatprep.subr.mxu0 0.0
    %733 = vmatpush2.msra.mxu0 0.0
    %734 = vmatprep.subr.mxu0 0.0
    %735 = vmatpush2.msra.mxu0 0.0
    %736 = vmatprep.subr.mxu0 0.0
    %737 = vmatpush2.msra.mxu0 0.0
    %738 = vmatprep.subr.mxu0 0.0
    %739 = vmatpush2.msra.mxu0 0.0
    %740 = vmatprep.subr.mxu0 0.0
    %741 = vmatpush2.msra.mxu0 0.0
    %742 = vmatprep.subr.mxu0 0.0
    %743 = vmatpush2.msra.mxu0 0.0
    %744 = vmatprep.subr.mxu0 0.0
    %745 = vmatpush2.msra.mxu0 0.0
    %746 = vmatprep.subr.mxu0 0.0
    %747 = vmatpush2.msra.mxu0 0.0
    %748 = vmatprep.subr.mxu0 0.0
    %749 = vmatpush2.msra.mxu0 0.0
    %750 = vmatprep.subr.mxu0 0.0
    %751 = vmatpush2.msra.mxu0 0.0
    %752 = vmatprep.subr.mxu0 0.0
    %753 = vmatpush2.msra.mxu0 0.0
    %754 = vmatprep.subr.mxu0 0.0
    %755 = vmatpush2.msra.mxu0 0.0
    %756 = vmatprep.subr.mxu0 0.0
    %757 = vmatpush2.msra.mxu0 0.0
    %758 = vmatprep.subr.mxu0 0.0
    %759 = vmatpush2.msra.mxu0 0.0
    %760 = vmatprep.mubr.f32.mxu0 0.0
    %761 = vmatmul.mubr.f32.gmra.mxu0 %v649
    %v762 = vpop.f32.mrf.mxu0
    %v763 = vadd.f32 0.0, %v762
    %v764 = vpop.f32.mrf.mxu0
    %765 = vmatprep.mubr.f32.mxu0 0.0
    %766 = vmatmul.mubr.f32.gmra.mxu0 %v652
    %v767 = vpop.f32.mrf.mxu0
    %v768 = vadd.f32 0.0, %v767
    %v769 = vpop.f32.mrf.mxu0
    %770 = vmatprep.mubr.f32.mxu0 0.0
    %771 = vmatmul.mubr.f32.gmra.mxu0 %v655
    %v772 = vpop.f32.mrf.mxu0
    %v773 = vadd.f32 0.0, %v772
    %v774 = vpop.f32.mrf.mxu0
    %775 = vmatprep.mubr.f32.mxu0 0.0
    %776 = vmatmul.mubr.f32.gmra.mxu0 %v658
    %v777 = vpop.f32.mrf.mxu0
    %v778 = vadd.f32 0.0, %v777
    %v779 = vpop.f32.mrf.mxu0
    %780 = vmatprep.mubr.f32.mxu0 0.0
    %781 = vmatmul.mubr.f32.gmra.mxu0 %v661
    %v782 = vpop.f32.mrf.mxu0
    %v783 = vadd.f32 0.0, %v782
    %v784 = vpop.f32.mrf.mxu0
    %785 = vmatprep.mubr.f32.mxu0 0.0
    %786 = vmatmul.mubr.f32.gmra.mxu0 %v664
    %v787 = vpop.f32.mrf.mxu0
    %v788 = vadd.f32 0.0, %v787
    %v789 = vpop.f32.mrf.mxu0
    %790 = vmatprep.mubr.f32.mxu0 0.0
    %791 = vmatmul.mubr.f32.gmra.mxu0 %v667
    %v792 = vpop.f32.mrf.mxu0
    %v793 = vadd.f32 0.0, %v792
    %v794 = vpop.f32.mrf.mxu0
    %795 = vmatprep.mubr.f32.mxu0 0.0
    %796 = vmatmul.mubr.f32.gmra.mxu0 %v670
    %v797 = vpop.f32.mrf.mxu0
    %v798 = vadd.f32 0.0, %v797
    %v799 = vpop.f32.mrf.mxu0
    %800 = vmatprep.mubr.f32.mxu0 0.0
    %801 = vmatmul.mubr.f32.gmra.mxu0 %v673
    %v802 = vpop.f32.mrf.mxu0
    %v803 = vadd.f32 0.0, %v802
    %v804 = vpop.f32.mrf.mxu0
    %805 = vmatprep.mubr.f32.mxu0 0.0
    %806 = vmatmul.mubr.f32.gmra.mxu0 %v676
    %v807 = vpop.f32.mrf.mxu0
    %v808 = vadd.f32 0.0, %v807
    %v809 = vpop.f32.mrf.mxu0
    %810 = vmatprep.mubr.f32.mxu0 0.0
    %811 = vmatmul.mubr.f32.gmra.mxu0 %v679
    %v812 = vpop.f32.mrf.mxu0
    %v813 = vadd.f32 0.0, %v812
    %v814 = vpop.f32.mrf.mxu0
    %815 = vmatprep.mubr.f32.mxu0 0.0
    %816 = vmatmul.mubr.f32.gmra.mxu0 %v682
    %v817 = vpop.f32.mrf.mxu0
    %v818 = vadd.f32 0.0, %v817
    %v819 = vpop.f32.mrf.mxu0
    %820 = vmatprep.mubr.f32.mxu0 0.0
    %821 = vmatmul.mubr.f32.gmra.mxu0 %v685
    %v822 = vpop.f32.mrf.mxu0
    %v823 = vadd.f32 0.0, %v822
    %v824 = vpop.f32.mrf.mxu0
    %825 = vmatprep.mubr.f32.mxu0 0.0
    %826 = vmatmul.mubr.f32.gmra.mxu0 %v688
    %v827 = vpop.f32.mrf.mxu0
    %v828 = vadd.f32 0.0, %v827
    %v829 = vpop.f32.mrf.mxu0
    %830 = vmatprep.mubr.f32.mxu0 0.0
    %831 = vmatmul.mubr.f32.gmra.mxu0 %v691
    %v832 = vpop.f32.mrf.mxu0
    %v833 = vadd.f32 0.0, %v832
    %v834 = vpop.f32.mrf.mxu0
    %835 = vmatprep.mubr.f32.mxu0 0.0
    %836 = vmatmul.mubr.f32.gmra.mxu0 %v694
    %v837 = vpop.f32.mrf.mxu0
    %v838 = vadd.f32 0.0, %v837
    %v839 = vpop.f32.mrf.mxu0
    %840 = vdwg.mxu0
    %v841 = vadd.f32 %v600, %v763
    %v842 = vadd.f32 %v601, %v768
    %v843 = vadd.f32 %v602, %v773
    %v844 = vadd.f32 %v603, %v778
    %v845 = vadd.f32 %v604, %v783
    %v846 = vadd.f32 %v605, %v788
    %v847 = vadd.f32 %v606, %v793
    %v848 = vadd.f32 %v607, %v798
    %v849 = vadd.f32 %v608, %v803
    %v850 = vadd.f32 %v609, %v808
    %v851 = vadd.f32 %v610, %v813
    %v852 = vadd.f32 %v611, %v818
    %v853 = vadd.f32 %v612, %v823
    %v854 = vadd.f32 %v613, %v828
    %v855 = vadd.f32 %v614, %v833
    %v856 = vadd.f32 %v615, %v838
    %857 = vst [vmem:[#allocation4] sm:$0xff] %v841
    %858 = vst [vmem:[#allocation4 + $0x8] sm:$0xff] %v842
    %859 = vst [vmem:[#allocation4 + $0x10] sm:$0xff] %v843
    %860 = vst [vmem:[#allocation4 + $0x18] sm:$0xff] %v844
    %861 = vst [vmem:[#allocation4 + $0x20] sm:$0xff] %v845
    %862 = vst [vmem:[#allocation4 + $0x28] sm:$0xff] %v846
    %863 = vst [vmem:[#allocation4 + $0x30] sm:$0xff] %v847
    %864 = vst [vmem:[#allocation4 + $0x38] sm:$0xff] %v848
    %865 = vst [vmem:[#allocation4 + $0x40] sm:$0xff] %v849
    %866 = vst [vmem:[#allocation4 + $0x48] sm:$0xff] %v850
    %867 = vst [vmem:[#allocation4 + $0x50] sm:$0xff] %v851
    %868 = vst [vmem:[#allocation4 + $0x58] sm:$0xff] %v852
    %869 = vst [vmem:[#allocation4 + $0x60] sm:$0xff] %v853
    %870 = vst [vmem:[#allocation4 + $0x68] sm:$0xff] %v854
    %871 = vst [vmem:[#allocation4 + $0x70] sm:$0xff] %v855
    %872 = vst [vmem:[#allocation4 + $0x78] sm:$0xff] %v856
    %v873 = vld [vmem:[#allocation5] sm:$0x1]
    %v875 = vsel %vm181, 1.0, 0
    %877 = vmatprep.subr.mxu0 0.0
    %878 = vmatpush1.msra.mxu0 0.0
    %879 = vmatprep.subr.mxu0 0.0
    %880 = vmatpush1.msra.mxu0 0.0
    %881 = vmatprep.subr.mxu0 0.0
    %882 = vmatpush1.msra.mxu0 0.0
    %883 = vmatprep.subr.mxu0 0.0
    %884 = vmatpush1.msra.mxu0 0.0
    %885 = vmatprep.subr.mxu0 0.0
    %886 = vmatpush1.msra.mxu0 0.0
    %887 = vmatprep.subr.mxu0 0.0
    %888 = vmatpush1.msra.mxu0 0.0
    %889 = vmatprep.subr.mxu0 0.0
    %890 = vmatpush1.msra.mxu0 0.0
    %891 = vmatprep.subr.mxu0 0.0
    %892 = vmatpush1.msra.mxu0 0.0
    %893 = vmatprep.subr.mxu0 0.0
    %894 = vmatpush1.msra.mxu0 0.0
    %895 = vmatprep.subr.mxu0 0.0
    %896 = vmatpush1.msra.mxu0 0.0
    %897 = vmatprep.subr.mxu0 0.0
    %898 = vmatpush1.msra.mxu0 0.0
    %899 = vmatprep.subr.mxu0 0.0
    %900 = vmatpush1.msra.mxu0 0.0
    %901 = vmatprep.subr.mxu0 0.0
    %902 = vmatpush1.msra.mxu0 0.0
    %903 = vmatprep.subr.mxu0 0.0
    %904 = vmatpush1.msra.mxu0 0.0
    %905 = vmatprep.subr.mxu0 0.0
    %906 = vmatpush1.msra.mxu0 %v121
    %907 = vmatprep.subr.mxu0 0.0
    %908 = vmatpush1.msra.mxu0 %v120
    %909 = vmatprep.subr.mxu0 0.0
    %910 = vmatpush2.msra.mxu0 0.0
    %911 = vmatprep.subr.mxu0 0.0
    %912 = vmatpush2.msra.mxu0 0.0
    %913 = vmatprep.subr.mxu0 0.0
    %914 = vmatpush2.msra.mxu0 0.0
    %915 = vmatprep.subr.mxu0 0.0
    %916 = vmatpush2.msra.mxu0 0.0
    %917 = vmatprep.subr.mxu0 0.0
    %918 = vmatpush2.msra.mxu0 0.0
    %919 = vmatprep.subr.mxu0 0.0
    %920 = vmatpush2.msra.mxu0 0.0
    %921 = vmatprep.subr.mxu0 0.0
    %922 = vmatpush2.msra.mxu0 0.0
    %923 = vmatprep.subr.mxu0 0.0
    %924 = vmatpush2.msra.mxu0 0.0
    %925 = vmatprep.subr.mxu0 0.0
    %926 = vmatpush2.msra.mxu0 0.0
    %927 = vmatprep.subr.mxu0 0.0
    %928 = vmatpush2.msra.mxu0 0.0
    %929 = vmatprep.subr.mxu0 0.0
    %930 = vmatpush2.msra.mxu0 0.0
    %931 = vmatprep.subr.mxu0 0.0
    %932 = vmatpush2.msra.mxu0 0.0
    %933 = vmatprep.subr.mxu0 0.0
    %934 = vmatpush2.msra.mxu0 0.0
    %935 = vmatprep.subr.mxu0 0.0
    %936 = vmatpush2.msra.mxu0 0.0
    %937 = vmatprep.subr.mxu0 0.0
    %938 = vmatpush2.msra.mxu0 0.0
    %939 = vmatprep.subr.mxu0 0.0
    %940 = vmatpush2.msra.mxu0 0.0
    %941 = vmatprep.mubr.f32.mxu0 0.0
    %942 = vmatmul.mubr.f32.gmra.mxu0 %v875
    %v943 = vpop.f32.mrf.mxu0
    %v944 = vadd.f32 0.0, %v943
    %v945 = vpop.f32.mrf.mxu0
    %946 = vdwg.mxu0
    %v947 = vadd.f32 %v873, %v944
    %948 = vst [vmem:[#allocation5] sm:$0x1] %v947
    %v949 = vld [vmem:[#allocation6] sm:$0x1]
    %950 = vmatprep.subr.mxu0 0.0
    %951 = vmatpush1.msra.mxu0 0.0
    %952 = vmatprep.subr.mxu0 0.0
    %953 = vmatpush1.msra.mxu0 0.0
    %954 = vmatprep.subr.mxu0 0.0
    %955 = vmatpush1.msra.mxu0 0.0
    %956 = vmatprep.subr.mxu0 0.0
    %957 = vmatpush1.msra.mxu0 0.0
    %958 = vmatprep.subr.mxu0 0.0
    %959 = vmatpush1.msra.mxu0 0.0
    %960 = vmatprep.subr.mxu0 0.0
    %961 = vmatpush1.msra.mxu0 0.0
    %962 = vmatprep.subr.mxu0 0.0
    %963 = vmatpush1.msra.mxu0 0.0
    %964 = vmatprep.subr.mxu0 0.0
    %965 = vmatpush1.msra.mxu0 0.0
    %966 = vmatprep.subr.mxu0 0.0
    %967 = vmatpush1.msra.mxu0 0.0
    %968 = vmatprep.subr.mxu0 0.0
    %969 = vmatpush1.msra.mxu0 0.0
    %970 = vmatprep.subr.mxu0 0.0
    %971 = vmatpush1.msra.mxu0 0.0
    %972 = vmatprep.subr.mxu0 0.0
    %973 = vmatpush1.msra.mxu0 0.0
    %974 = vmatprep.subr.mxu0 0.0
    %975 = vmatpush1.msra.mxu0 0.0
    %976 = vmatprep.subr.mxu0 0.0
    %977 = vmatpush1.msra.mxu0 0.0
    %978 = vmatprep.subr.mxu0 0.0
    %979 = vmatpush1.msra.mxu0 %v132
    %980 = vmatprep.subr.mxu0 0.0
    %981 = vmatpush1.msra.mxu0 %v131
    %982 = vmatprep.subr.mxu0 0.0
    %983 = vmatpush2.msra.mxu0 0.0
    %984 = vmatprep.subr.mxu0 0.0
    %985 = vmatpush2.msra.mxu0 0.0
    %986 = vmatprep.subr.mxu0 0.0
    %987 = vmatpush2.msra.mxu0 0.0
    %988 = vmatprep.subr.mxu0 0.0
    %989 = vmatpush2.msra.mxu0 0.0
    %990 = vmatprep.subr.mxu0 0.0
    %991 = vmatpush2.msra.mxu0 0.0
    %992 = vmatprep.subr.mxu0 0.0
    %993 = vmatpush2.msra.mxu0 0.0
    %994 = vmatprep.subr.mxu0 0.0
    %995 = vmatpush2.msra.mxu0 0.0
    %996 = vmatprep.subr.mxu0 0.0
    %997 = vmatpush2.msra.mxu0 0.0
    %998 = vmatprep.subr.mxu0 0.0
    %999 = vmatpush2.msra.mxu0 0.0
    %1000 = vmatprep.subr.mxu0 0.0
    %1001 = vmatpush2.msra.mxu0 0.0
    %1002 = vmatprep.subr.mxu0 0.0
    %1003 = vmatpush2.msra.mxu0 0.0
    %1004 = vmatprep.subr.mxu0 0.0
    %1005 = vmatpush2.msra.mxu0 0.0
    %1006 = vmatprep.subr.mxu0 0.0
    %1007 = vmatpush2.msra.mxu0 0.0
    %1008 = vmatprep.subr.mxu0 0.0
    %1009 = vmatpush2.msra.mxu0 0.0
    %1010 = vmatprep.subr.mxu0 0.0
    %1011 = vmatpush2.msra.mxu0 0.0
    %1012 = vmatprep.subr.mxu0 0.0
    %1013 = vmatpush2.msra.mxu0 0.0
    %1014 = vmatprep.mubr.f32.mxu0 0.0
    %1015 = vmatmul.mubr.f32.gmra.mxu0 %v875
    %v1016 = vpop.f32.mrf.mxu0
    %v1017 = vadd.f32 0.0, %v1016
    %v1018 = vpop.f32.mrf.mxu0
    %1019 = vdwg.mxu0
    %v1020 = vadd.f32 %v949, %v1017
    %1021 = vst [vmem:[#allocation6] sm:$0x1] %v1020
    // Predicated region
    $region34: #{tpu_custom_call.1} parent=1 // pred_check
      %p1022 = pneg %p57
    $region35: #{tpu_custom_call.1} parent=1 // pred_check_branch
      %1024 = sbr.rel (%p1022) target = $region37
    $region36: #{tpu_custom_call.1} parent=1 // pred_region
      %v1025 = vld [vmem:[#allocation5] sm:$0x1]
      %v1026 = vmul.f32 %v1025, 0.0625
      %v1027 = vld [vmem:[#allocation6] sm:$0x1]
      %v1028 = vmul.f32 %v1027, 0.0625
      %v1029 = vld [vmem:[#allocation2] sm:$0xff]
      %v1030 = vld [vmem:[#allocation2 + $0x8] sm:$0xff]
      %v1031 = vld [vmem:[#allocation2 + $0x10] sm:$0xff]
      %v1032 = vld [vmem:[#allocation2 + $0x18] sm:$0xff]
      %v1033 = vld [vmem:[#allocation2 + $0x20] sm:$0xff]
      %v1034 = vld [vmem:[#allocation2 + $0x28] sm:$0xff]
      %v1035 = vld [vmem:[#allocation2 + $0x30] sm:$0xff]
      %v1036 = vld [vmem:[#allocation2 + $0x38] sm:$0xff]
      %v1037 = vld [vmem:[#allocation2 + $0x40] sm:$0xff]
      %v1038 = vld [vmem:[#allocation2 + $0x48] sm:$0xff]
      %v1039 = vld [vmem:[#allocation2 + $0x50] sm:$0xff]
      %v1040 = vld [vmem:[#allocation2 + $0x58] sm:$0xff]
      %v1041 = vld [vmem:[#allocation2 + $0x60] sm:$0xff]
      %v1042 = vld [vmem:[#allocation2 + $0x68] sm:$0xff]
      %v1043 = vld [vmem:[#allocation2 + $0x70] sm:$0xff]
      %v1044 = vld [vmem:[#allocation2 + $0x78] sm:$0xff]
      %v1045 = vmul.f32 %v1029, 0.0625
      %v1046 = vmul.f32 %v1030, 0.0625
      %v1047 = vmul.f32 %v1031, 0.0625
      %v1048 = vmul.f32 %v1032, 0.0625
      %v1049 = vmul.f32 %v1033, 0.0625
      %v1050 = vmul.f32 %v1034, 0.0625
      %v1051 = vmul.f32 %v1035, 0.0625
      %v1052 = vmul.f32 %v1036, 0.0625
      %v1053 = vmul.f32 %v1037, 0.0625
      %v1054 = vmul.f32 %v1038, 0.0625
      %v1055 = vmul.f32 %v1039, 0.0625
      %v1056 = vmul.f32 %v1040, 0.0625
      %v1057 = vmul.f32 %v1041, 0.0625
      %v1058 = vmul.f32 %v1042, 0.0625
      %v1059 = vmul.f32 %v1043, 0.0625
      %v1060 = vmul.f32 %v1044, 0.0625
      %1061 = vxpose.xlu0.b32.start [1/16] %v1026, 128
      %1062 = vxpose.xlu0.b32.cont [2/16] 0.0, 128
      %1063 = vxpose.xlu0.b32.cont [3/16] 0.0, 128
      %1064 = vxpose.xlu0.b32.cont [4/16] 0.0, 128
      %1065 = vxpose.xlu0.b32.cont [5/16] 0.0, 128
      %1066 = vxpose.xlu0.b32.cont [6/16] 0.0, 128
      %1067 = vxpose.xlu0.b32.cont [7/16] 0.0, 128
      %1068 = vxpose.xlu0.b32.cont [8/16] 0.0, 128
      %1069 = vxpose.xlu0.b32.cont [9/16] 0.0, 128
      %1070 = vxpose.xlu0.b32.cont [10/16] 0.0, 128
      %1071 = vxpose.xlu0.b32.cont [11/16] 0.0, 128
      %1072 = vxpose.xlu0.b32.cont [12/16] 0.0, 128
      %1073 = vxpose.xlu0.b32.cont [13/16] 0.0, 128
      %1074 = vxpose.xlu0.b32.cont [14/16] 0.0, 128
      %1075 = vxpose.xlu0.b32.cont [15/16] 0.0, 128
      %1076 = vxpose.xlu0.b32.end [16/16] 0.0, 128
      %v1077 = vpop.trf.xlu0
      %v1078 = vpop.trf.xlu0
      %v1079 = vpop.trf.xlu0
      %v1080 = vpop.trf.xlu0
      %v1081 = vpop.trf.xlu0
      %v1082 = vpop.trf.xlu0
      %v1083 = vpop.trf.xlu0
      %v1084 = vpop.trf.xlu0
      %v1085 = vpop.trf.xlu0
      %v1086 = vpop.trf.xlu0
      %v1087 = vpop.trf.xlu0
      %v1088 = vpop.trf.xlu0
      %v1089 = vpop.trf.xlu0
      %v1090 = vpop.trf.xlu0
      %v1091 = vpop.trf.xlu0
      %v1092 = vpop.trf.xlu0
      %vm1093 = vcmask 7168
      %v1095 = vsel %vm1093, %v1077, 0
      %v1098 = vsel %vm1093, %v1078, 0
      %v1101 = vsel %vm1093, %v1079, 0
      %v1104 = vsel %vm1093, %v1080, 0
      %v1107 = vsel %vm1093, %v1081, 0
      %v1110 = vsel %vm1093, %v1082, 0
      %v1113 = vsel %vm1093, %v1083, 0
      %v1116 = vsel %vm1093, %v1084, 0
      %v1119 = vsel %vm1093, %v1085, 0
      %v1122 = vsel %vm1093, %v1086, 0
      %v1125 = vsel %vm1093, %v1087, 0
      %v1128 = vsel %vm1093, %v1088, 0
      %v1131 = vsel %vm1093, %v1089, 0
      %v1134 = vsel %vm1093, %v1090, 0
      %v1137 = vsel %vm1093, %v1091, 0
      %v1140 = vsel %vm1093, %v1092, 0
      %vm1142 = vcmask 1040384
      %v1144 = vsel %vm1142, %v1028, 0
      %1146 = vmatprep.subr.mxu0 0.0
      %1147 = vmatpush1.msra.mxu0 0.0
      %1148 = vmatprep.subr.mxu0 0.0
      %1149 = vmatpush1.msra.mxu0 0.0
      %1150 = vmatprep.subr.mxu0 0.0
      %1151 = vmatpush1.msra.mxu0 0.0
      %1152 = vmatprep.subr.mxu0 0.0
      %1153 = vmatpush1.msra.mxu0 0.0
      %1154 = vmatprep.subr.mxu0 0.0
      %1155 = vmatpush1.msra.mxu0 0.0
      %1156 = vmatprep.subr.mxu0 0.0
      %1157 = vmatpush1.msra.mxu0 0.0
      %1158 = vmatprep.subr.mxu0 0.0
      %1159 = vmatpush1.msra.mxu0 0.0
      %1160 = vmatprep.subr.mxu0 0.0
      %1161 = vmatpush1.msra.mxu0 0.0
      %1162 = vmatprep.subr.mxu0 0.0
      %1163 = vmatpush1.msra.mxu0 0.0
      %1164 = vmatprep.subr.mxu0 0.0
      %1165 = vmatpush1.msra.mxu0 0.0
      %1166 = vmatprep.subr.mxu0 0.0
      %1167 = vmatpush1.msra.mxu0 0.0
      %1168 = vmatprep.subr.mxu0 0.0
      %1169 = vmatpush1.msra.mxu0 0.0
      %1170 = vmatprep.subr.mxu0 0.0
      %1171 = vmatpush1.msra.mxu0 0.0
      %1172 = vmatprep.subr.mxu0 0.0
      %1173 = vmatpush1.msra.mxu0 0.0
      %1174 = vmatprep.subr.mxu0 0.0
      %1175 = vmatpush1.msra.mxu0 0.0
      %1176 = vmatprep.subr.mxu0 0.0
      %1177 = vmatpush1.msra.mxu0 %v1144
      %1178 = vmatprep.subr.mxu0 0.0
      %1179 = vmatpush2.msra.mxu0 0.0
      %1180 = vmatprep.subr.mxu0 0.0
      %1181 = vmatpush2.msra.mxu0 0.0
      %1182 = vmatprep.subr.mxu0 0.0
      %1183 = vmatpush2.msra.mxu0 0.0
      %1184 = vmatprep.subr.mxu0 0.0
      %1185 = vmatpush2.msra.mxu0 0.0
      %1186 = vmatprep.subr.mxu0 0.0
      %1187 = vmatpush2.msra.mxu0 0.0
      %1188 = vmatprep.subr.mxu0 0.0
      %1189 = vmatpush2.msra.mxu0 0.0
      %1190 = vmatprep.subr.mxu0 0.0
      %1191 = vmatpush2.msra.mxu0 0.0
      %1192 = vmatprep.subr.mxu0 0.0
      %1193 = vmatpush2.msra.mxu0 0.0
      %1194 = vmatprep.subr.mxu0 0.0
      %1195 = vmatpush2.msra.mxu0 0.0
      %1196 = vmatprep.subr.mxu0 0.0
      %1197 = vmatpush2.msra.mxu0 0.0
      %1198 = vmatprep.subr.mxu0 0.0
      %1199 = vmatpush2.msra.mxu0 0.0
      %1200 = vmatprep.subr.mxu0 0.0
      %1201 = vmatpush2.msra.mxu0 0.0
      %1202 = vmatprep.subr.mxu0 0.0
      %1203 = vmatpush2.msra.mxu0 0.0
      %1204 = vmatprep.subr.mxu0 0.0
      %1205 = vmatpush2.msra.mxu0 0.0
      %1206 = vmatprep.subr.mxu0 0.0
      %1207 = vmatpush2.msra.mxu0 0.0
      %1208 = vmatprep.subr.mxu0 0.0
      %1209 = vmatpush2.msra.mxu0 0.0
      %1210 = vmatprep.mubr.f32.mxu0 0.0
      %1211 = vmatmul.mubr.f32.gmra.mxu0 %v1095
      %v1212 = vpop.f32.mrf.mxu0
      %v1213 = vadd.f32 0.0, %v1212
      %v1214 = vpop.f32.mrf.mxu0
      %1215 = vmatprep.mubr.f32.mxu0 0.0
      %1216 = vmatmul.mubr.f32.gmra.mxu0 %v1098
      %v1217 = vpop.f32.mrf.mxu0
      %v1218 = vadd.f32 0.0, %v1217
      %v1219 = vpop.f32.mrf.mxu0
      %1220 = vmatprep.mubr.f32.mxu0 0.0
      %1221 = vmatmul.mubr.f32.gmra.mxu0 %v1101
      %v1222 = vpop.f32.mrf.mxu0
      %v1223 = vadd.f32 0.0, %v1222
      %v1224 = vpop.f32.mrf.mxu0
      %1225 = vmatprep.mubr.f32.mxu0 0.0
      %1226 = vmatmul.mubr.f32.gmra.mxu0 %v1104
      %v1227 = vpop.f32.mrf.mxu0
      %v1228 = vadd.f32 0.0, %v1227
      %v1229 = vpop.f32.mrf.mxu0
      %1230 = vmatprep.mubr.f32.mxu0 0.0
      %1231 = vmatmul.mubr.f32.gmra.mxu0 %v1107
      %v1232 = vpop.f32.mrf.mxu0
      %v1233 = vadd.f32 0.0, %v1232
      %v1234 = vpop.f32.mrf.mxu0
      %1235 = vmatprep.mubr.f32.mxu0 0.0
      %1236 = vmatmul.mubr.f32.gmra.mxu0 %v1110
      %v1237 = vpop.f32.mrf.mxu0
      %v1238 = vadd.f32 0.0, %v1237
      %v1239 = vpop.f32.mrf.mxu0
      %1240 = vmatprep.mubr.f32.mxu0 0.0
      %1241 = vmatmul.mubr.f32.gmra.mxu0 %v1113
      %v1242 = vpop.f32.mrf.mxu0
      %v1243 = vadd.f32 0.0, %v1242
      %v1244 = vpop.f32.mrf.mxu0
      %1245 = vmatprep.mubr.f32.mxu0 0.0
      %1246 = vmatmul.mubr.f32.gmra.mxu0 %v1116
      %v1247 = vpop.f32.mrf.mxu0
      %v1248 = vadd.f32 0.0, %v1247
      %v1249 = vpop.f32.mrf.mxu0
      %1250 = vmatprep.mubr.f32.mxu0 0.0
      %1251 = vmatmul.mubr.f32.gmra.mxu0 %v1119
      %v1252 = vpop.f32.mrf.mxu0
      %v1253 = vadd.f32 0.0, %v1252
      %v1254 = vpop.f32.mrf.mxu0
      %1255 = vmatprep.mubr.f32.mxu0 0.0
      %1256 = vmatmul.mubr.f32.gmra.mxu0 %v1122
      %v1257 = vpop.f32.mrf.mxu0
      %v1258 = vadd.f32 0.0, %v1257
      %v1259 = vpop.f32.mrf.mxu0
      %1260 = vmatprep.mubr.f32.mxu0 0.0
      %1261 = vmatmul.mubr.f32.gmra.mxu0 %v1125
      %v1262 = vpop.f32.mrf.mxu0
      %v1263 = vadd.f32 0.0, %v1262
      %v1264 = vpop.f32.mrf.mxu0
      %1265 = vmatprep.mubr.f32.mxu0 0.0
      %1266 = vmatmul.mubr.f32.gmra.mxu0 %v1128
      %v1267 = vpop.f32.mrf.mxu0
      %v1268 = vadd.f32 0.0, %v1267
      %v1269 = vpop.f32.mrf.mxu0
      %1270 = vmatprep.mubr.f32.mxu0 0.0
      %1271 = vmatmul.mubr.f32.gmra.mxu0 %v1131
      %v1272 = vpop.f32.mrf.mxu0
      %v1273 = vadd.f32 0.0, %v1272
      %v1274 = vpop.f32.mrf.mxu0
      %1275 = vmatprep.mubr.f32.mxu0 0.0
      %1276 = vmatmul.mubr.f32.gmra.mxu0 %v1134
      %v1277 = vpop.f32.mrf.mxu0
      %v1278 = vadd.f32 0.0, %v1277
      %v1279 = vpop.f32.mrf.mxu0
      %1280 = vmatprep.mubr.f32.mxu0 0.0
      %1281 = vmatmul.mubr.f32.gmra.mxu0 %v1137
      %v1282 = vpop.f32.mrf.mxu0
      %v1283 = vadd.f32 0.0, %v1282
      %v1284 = vpop.f32.mrf.mxu0
      %1285 = vmatprep.mubr.f32.mxu0 0.0
      %1286 = vmatmul.mubr.f32.gmra.mxu0 %v1140
      %v1287 = vpop.f32.mrf.mxu0
      %v1288 = vadd.f32 0.0, %v1287
      %v1289 = vpop.f32.mrf.mxu0
      %1290 = vdwg.mxu0
      %v1291 = vsub.f32 %v1045, %v1213
      %v1292 = vsub.f32 %v1046, %v1218
      %v1293 = vsub.f32 %v1047, %v1223
      %v1294 = vsub.f32 %v1048, %v1228
      %v1295 = vsub.f32 %v1049, %v1233
      %v1296 = vsub.f32 %v1050, %v1238
      %v1297 = vsub.f32 %v1051, %v1243
      %v1298 = vsub.f32 %v1052, %v1248
      %v1299 = vsub.f32 %v1053, %v1253
      %v1300 = vsub.f32 %v1054, %v1258
      %v1301 = vsub.f32 %v1055, %v1263
      %v1302 = vsub.f32 %v1056, %v1268
      %v1303 = vsub.f32 %v1057, %v1273
      %v1304 = vsub.f32 %v1058, %v1278
      %v1305 = vsub.f32 %v1059, %v1283
      %v1306 = vsub.f32 %v1060, %v1288
      %v1307 = vld [vmem:[#allocation3] sm:$0xff]
      %v1308 = vld [vmem:[#allocation3 + $0x8] sm:$0xff]
      %v1309 = vld [vmem:[#allocation3 + $0x10] sm:$0xff]
      %v1310 = vld [vmem:[#allocation3 + $0x18] sm:$0xff]
      %v1311 = vld [vmem:[#allocation3 + $0x20] sm:$0xff]
      %v1312 = vld [vmem:[#allocation3 + $0x28] sm:$0xff]
      %v1313 = vld [vmem:[#allocation3 + $0x30] sm:$0xff]
      %v1314 = vld [vmem:[#allocation3 + $0x38] sm:$0xff]
      %v1315 = vld [vmem:[#allocation3 + $0x40] sm:$0xff]
      %v1316 = vld [vmem:[#allocation3 + $0x48] sm:$0xff]
      %v1317 = vld [vmem:[#allocation3 + $0x50] sm:$0xff]
      %v1318 = vld [vmem:[#allocation3 + $0x58] sm:$0xff]
      %v1319 = vld [vmem:[#allocation3 + $0x60] sm:$0xff]
      %v1320 = vld [vmem:[#allocation3 + $0x68] sm:$0xff]
      %v1321 = vld [vmem:[#allocation3 + $0x70] sm:$0xff]
      %v1322 = vld [vmem:[#allocation3 + $0x78] sm:$0xff]
      %v1323 = vmul.f32 %v1307, 0.0625
      %v1324 = vmul.f32 %v1308, 0.0625
      %v1325 = vmul.f32 %v1309, 0.0625
      %v1326 = vmul.f32 %v1310, 0.0625
      %v1327 = vmul.f32 %v1311, 0.0625
      %v1328 = vmul.f32 %v1312, 0.0625
      %v1329 = vmul.f32 %v1313, 0.0625
      %v1330 = vmul.f32 %v1314, 0.0625
      %v1331 = vmul.f32 %v1315, 0.0625
      %v1332 = vmul.f32 %v1316, 0.0625
      %v1333 = vmul.f32 %v1317, 0.0625
      %v1334 = vmul.f32 %v1318, 0.0625
      %v1335 = vmul.f32 %v1319, 0.0625
      %v1336 = vmul.f32 %v1320, 0.0625
      %v1337 = vmul.f32 %v1321, 0.0625
      %v1338 = vmul.f32 %v1322, 0.0625
      %v1340 = vsel %vm1142, %v1026, 0
      %1342 = vmatprep.subr.mxu0 0.0
      %1343 = vmatpush1.msra.mxu0 0.0
      %1344 = vmatprep.subr.mxu0 0.0
      %1345 = vmatpush1.msra.mxu0 0.0
      %1346 = vmatprep.subr.mxu0 0.0
      %1347 = vmatpush1.msra.mxu0 0.0
      %1348 = vmatprep.subr.mxu0 0.0
      %1349 = vmatpush1.msra.mxu0 0.0
      %1350 = vmatprep.subr.mxu0 0.0
      %1351 = vmatpush1.msra.mxu0 0.0
      %1352 = vmatprep.subr.mxu0 0.0
      %1353 = vmatpush1.msra.mxu0 0.0
      %1354 = vmatprep.subr.mxu0 0.0
      %1355 = vmatpush1.msra.mxu0 0.0
      %1356 = vmatprep.subr.mxu0 0.0
      %1357 = vmatpush1.msra.mxu0 0.0
      %1358 = vmatprep.subr.mxu0 0.0
      %1359 = vmatpush1.msra.mxu0 0.0
      %1360 = vmatprep.subr.mxu0 0.0
      %1361 = vmatpush1.msra.mxu0 0.0
      %1362 = vmatprep.subr.mxu0 0.0
      %1363 = vmatpush1.msra.mxu0 0.0
      %1364 = vmatprep.subr.mxu0 0.0
      %1365 = vmatpush1.msra.mxu0 0.0
      %1366 = vmatprep.subr.mxu0 0.0
      %1367 = vmatpush1.msra.mxu0 0.0
      %1368 = vmatprep.subr.mxu0 0.0
      %1369 = vmatpush1.msra.mxu0 0.0
      %1370 = vmatprep.subr.mxu0 0.0
      %1371 = vmatpush1.msra.mxu0 0.0
      %1372 = vmatprep.subr.mxu0 0.0
      %1373 = vmatpush1.msra.mxu0 %v1340
      %1374 = vmatprep.subr.mxu0 0.0
      %1375 = vmatpush2.msra.mxu0 0.0
      %1376 = vmatprep.subr.mxu0 0.0
      %1377 = vmatpush2.msra.mxu0 0.0
      %1378 = vmatprep.subr.mxu0 0.0
      %1379 = vmatpush2.msra.mxu0 0.0
      %1380 = vmatprep.subr.mxu0 0.0
      %1381 = vmatpush2.msra.mxu0 0.0
      %1382 = vmatprep.subr.mxu0 0.0
      %1383 = vmatpush2.msra.mxu0 0.0
      %1384 = vmatprep.subr.mxu0 0.0
      %1385 = vmatpush2.msra.mxu0 0.0
      %1386 = vmatprep.subr.mxu0 0.0
      %1387 = vmatpush2.msra.mxu0 0.0
      %1388 = vmatprep.subr.mxu0 0.0
      %1389 = vmatpush2.msra.mxu0 0.0
      %1390 = vmatprep.subr.mxu0 0.0
      %1391 = vmatpush2.msra.mxu0 0.0
      %1392 = vmatprep.subr.mxu0 0.0
      %1393 = vmatpush2.msra.mxu0 0.0
      %1394 = vmatprep.subr.mxu0 0.0
      %1395 = vmatpush2.msra.mxu0 0.0
      %1396 = vmatprep.subr.mxu0 0.0
      %1397 = vmatpush2.msra.mxu0 0.0
      %1398 = vmatprep.subr.mxu0 0.0
      %1399 = vmatpush2.msra.mxu0 0.0
      %1400 = vmatprep.subr.mxu0 0.0
      %1401 = vmatpush2.msra.mxu0 0.0
      %1402 = vmatprep.subr.mxu0 0.0
      %1403 = vmatpush2.msra.mxu0 0.0
      %1404 = vmatprep.subr.mxu0 0.0
      %1405 = vmatpush2.msra.mxu0 0.0
      %1406 = vmatprep.mubr.f32.mxu0 0.0
      %1407 = vmatmul.mubr.f32.gmra.mxu0 %v1095
      %v1408 = vpop.f32.mrf.mxu0
      %v1409 = vadd.f32 0.0, %v1408
      %v1410 = vpop.f32.mrf.mxu0
      %1411 = vmatprep.mubr.f32.mxu0 0.0
      %1412 = vmatmul.mubr.f32.gmra.mxu0 %v1098
      %v1413 = vpop.f32.mrf.mxu0
      %v1414 = vadd.f32 0.0, %v1413
      %v1415 = vpop.f32.mrf.mxu0
      %1416 = vmatprep.mubr.f32.mxu0 0.0
      %1417 = vmatmul.mubr.f32.gmra.mxu0 %v1101
      %v1418 = vpop.f32.mrf.mxu0
      %v1419 = vadd.f32 0.0, %v1418
      %v1420 = vpop.f32.mrf.mxu0
      %1421 = vmatprep.mubr.f32.mxu0 0.0
      %1422 = vmatmul.mubr.f32.gmra.mxu0 %v1104
      %v1423 = vpop.f32.mrf.mxu0
      %v1424 = vadd.f32 0.0, %v1423
      %v1425 = vpop.f32.mrf.mxu0
      %1426 = vmatprep.mubr.f32.mxu0 0.0
      %1427 = vmatmul.mubr.f32.gmra.mxu0 %v1107
      %v1428 = vpop.f32.mrf.mxu0
      %v1429 = vadd.f32 0.0, %v1428
      %v1430 = vpop.f32.mrf.mxu0
      %1431 = vmatprep.mubr.f32.mxu0 0.0
      %1432 = vmatmul.mubr.f32.gmra.mxu0 %v1110
      %v1433 = vpop.f32.mrf.mxu0
      %v1434 = vadd.f32 0.0, %v1433
      %v1435 = vpop.f32.mrf.mxu0
      %1436 = vmatprep.mubr.f32.mxu0 0.0
      %1437 = vmatmul.mubr.f32.gmra.mxu0 %v1113
      %v1438 = vpop.f32.mrf.mxu0
      %v1439 = vadd.f32 0.0, %v1438
      %v1440 = vpop.f32.mrf.mxu0
      %1441 = vmatprep.mubr.f32.mxu0 0.0
      %1442 = vmatmul.mubr.f32.gmra.mxu0 %v1116
      %v1443 = vpop.f32.mrf.mxu0
      %v1444 = vadd.f32 0.0, %v1443
      %v1445 = vpop.f32.mrf.mxu0
      %1446 = vmatprep.mubr.f32.mxu0 0.0
      %1447 = vmatmul.mubr.f32.gmra.mxu0 %v1119
      %v1448 = vpop.f32.mrf.mxu0
      %v1449 = vadd.f32 0.0, %v1448
      %v1450 = vpop.f32.mrf.mxu0
      %1451 = vmatprep.mubr.f32.mxu0 0.0
      %1452 = vmatmul.mubr.f32.gmra.mxu0 %v1122
      %v1453 = vpop.f32.mrf.mxu0
      %v1454 = vadd.f32 0.0, %v1453
      %v1455 = vpop.f32.mrf.mxu0
      %1456 = vmatprep.mubr.f32.mxu0 0.0
      %1457 = vmatmul.mubr.f32.gmra.mxu0 %v1125
      %v1458 = vpop.f32.mrf.mxu0
      %v1459 = vadd.f32 0.0, %v1458
      %v1460 = vpop.f32.mrf.mxu0
      %1461 = vmatprep.mubr.f32.mxu0 0.0
      %1462 = vmatmul.mubr.f32.gmra.mxu0 %v1128
      %v1463 = vpop.f32.mrf.mxu0
      %v1464 = vadd.f32 0.0, %v1463
      %v1465 = vpop.f32.mrf.mxu0
      %1466 = vmatprep.mubr.f32.mxu0 0.0
      %1467 = vmatmul.mubr.f32.gmra.mxu0 %v1131
      %v1468 = vpop.f32.mrf.mxu0
      %v1469 = vadd.f32 0.0, %v1468
      %v1470 = vpop.f32.mrf.mxu0
      %1471 = vmatprep.mubr.f32.mxu0 0.0
      %1472 = vmatmul.mubr.f32.gmra.mxu0 %v1134
      %v1473 = vpop.f32.mrf.mxu0
      %v1474 = vadd.f32 0.0, %v1473
      %v1475 = vpop.f32.mrf.mxu0
      %1476 = vmatprep.mubr.f32.mxu0 0.0
      %1477 = vmatmul.mubr.f32.gmra.mxu0 %v1137
      %v1478 = vpop.f32.mrf.mxu0
      %v1479 = vadd.f32 0.0, %v1478
      %v1480 = vpop.f32.mrf.mxu0
      %1481 = vmatprep.mubr.f32.mxu0 0.0
      %1482 = vmatmul.mubr.f32.gmra.mxu0 %v1140
      %v1483 = vpop.f32.mrf.mxu0
      %v1484 = vadd.f32 0.0, %v1483
      %v1485 = vpop.f32.mrf.mxu0
      %1486 = vdwg.mxu0
      %v1487 = vsub.f32 %v1323, %v1409
      %v1488 = vsub.f32 %v1324, %v1414
      %v1489 = vsub.f32 %v1325, %v1419
      %v1490 = vsub.f32 %v1326, %v1424
      %v1491 = vsub.f32 %v1327, %v1429
      %v1492 = vsub.f32 %v1328, %v1434
      %v1493 = vsub.f32 %v1329, %v1439
      %v1494 = vsub.f32 %v1330, %v1444
      %v1495 = vsub.f32 %v1331, %v1449
      %v1496 = vsub.f32 %v1332, %v1454
      %v1497 = vsub.f32 %v1333, %v1459
      %v1498 = vsub.f32 %v1334, %v1464
      %v1499 = vsub.f32 %v1335, %v1469
      %v1500 = vsub.f32 %v1336, %v1474
      %v1501 = vsub.f32 %v1337, %v1479
      %v1502 = vsub.f32 %v1338, %v1484
      %v1503 = vld [vmem:[#allocation4] sm:$0xff]
      %v1504 = vld [vmem:[#allocation4 + $0x8] sm:$0xff]
      %v1505 = vld [vmem:[#allocation4 + $0x10] sm:$0xff]
      %v1506 = vld [vmem:[#allocation4 + $0x18] sm:$0xff]
      %v1507 = vld [vmem:[#allocation4 + $0x20] sm:$0xff]
      %v1508 = vld [vmem:[#allocation4 + $0x28] sm:$0xff]
      %v1509 = vld [vmem:[#allocation4 + $0x30] sm:$0xff]
      %v1510 = vld [vmem:[#allocation4 + $0x38] sm:$0xff]
      %v1511 = vld [vmem:[#allocation4 + $0x40] sm:$0xff]
      %v1512 = vld [vmem:[#allocation4 + $0x48] sm:$0xff]
      %v1513 = vld [vmem:[#allocation4 + $0x50] sm:$0xff]
      %v1514 = vld [vmem:[#allocation4 + $0x58] sm:$0xff]
      %v1515 = vld [vmem:[#allocation4 + $0x60] sm:$0xff]
      %v1516 = vld [vmem:[#allocation4 + $0x68] sm:$0xff]
      %v1517 = vld [vmem:[#allocation4 + $0x70] sm:$0xff]
      %v1518 = vld [vmem:[#allocation4 + $0x78] sm:$0xff]
      %v1519 = vmul.f32 %v1503, 0.0625
      %v1520 = vmul.f32 %v1504, 0.0625
      %v1521 = vmul.f32 %v1505, 0.0625
      %v1522 = vmul.f32 %v1506, 0.0625
      %v1523 = vmul.f32 %v1507, 0.0625
      %v1524 = vmul.f32 %v1508, 0.0625
      %v1525 = vmul.f32 %v1509, 0.0625
      %v1526 = vmul.f32 %v1510, 0.0625
      %v1527 = vmul.f32 %v1511, 0.0625
      %v1528 = vmul.f32 %v1512, 0.0625
      %v1529 = vmul.f32 %v1513, 0.0625
      %v1530 = vmul.f32 %v1514, 0.0625
      %v1531 = vmul.f32 %v1515, 0.0625
      %v1532 = vmul.f32 %v1516, 0.0625
      %v1533 = vmul.f32 %v1517, 0.0625
      %v1534 = vmul.f32 %v1518, 0.0625
      %1535 = vxpose.xlu0.b32.start [1/16] %v1028, 128
      %1536 = vxpose.xlu0.b32.cont [2/16] 0.0, 128
      %1537 = vxpose.xlu0.b32.cont [3/16] 0.0, 128
      %1538 = vxpose.xlu0.b32.cont [4/16] 0.0, 128
      %1539 = vxpose.xlu0.b32.cont [5/16] 0.0, 128
      %1540 = vxpose.xlu0.b32.cont [6/16] 0.0, 128
      %1541 = vxpose.xlu0.b32.cont [7/16] 0.0, 128
      %1542 = vxpose.xlu0.b32.cont [8/16] 0.0, 128
      %1543 = vxpose.xlu0.b32.cont [9/16] 0.0, 128
      %1544 = vxpose.xlu0.b32.cont [10/16] 0.0, 128
      %1545 = vxpose.xlu0.b32.cont [11/16] 0.0, 128
      %1546 = vxpose.xlu0.b32.cont [12/16] 0.0, 128
      %1547 = vxpose.xlu0.b32.cont [13/16] 0.0, 128
      %1548 = vxpose.xlu0.b32.cont [14/16] 0.0, 128
      %1549 = vxpose.xlu0.b32.cont [15/16] 0.0, 128
      %1550 = vxpose.xlu0.b32.end [16/16] 0.0, 128
      %v1551 = vpop.trf.xlu0
      %v1552 = vpop.trf.xlu0
      %v1553 = vpop.trf.xlu0
      %v1554 = vpop.trf.xlu0
      %v1555 = vpop.trf.xlu0
      %v1556 = vpop.trf.xlu0
      %v1557 = vpop.trf.xlu0
      %v1558 = vpop.trf.xlu0
      %v1559 = vpop.trf.xlu0
      %v1560 = vpop.trf.xlu0
      %v1561 = vpop.trf.xlu0
      %v1562 = vpop.trf.xlu0
      %v1563 = vpop.trf.xlu0
      %v1564 = vpop.trf.xlu0
      %v1565 = vpop.trf.xlu0
      %v1566 = vpop.trf.xlu0
      %v1568 = vsel %vm1093, %v1551, 0
      %v1571 = vsel %vm1093, %v1552, 0
      %v1574 = vsel %vm1093, %v1553, 0
      %v1577 = vsel %vm1093, %v1554, 0
      %v1580 = vsel %vm1093, %v1555, 0
      %v1583 = vsel %vm1093, %v1556, 0
      %v1586 = vsel %vm1093, %v1557, 0
      %v1589 = vsel %vm1093, %v1558, 0
      %v1592 = vsel %vm1093, %v1559, 0
      %v1595 = vsel %vm1093, %v1560, 0
      %v1598 = vsel %vm1093, %v1561, 0
      %v1601 = vsel %vm1093, %v1562, 0
      %v1604 = vsel %vm1093, %v1563, 0
      %v1607 = vsel %vm1093, %v1564, 0
      %v1610 = vsel %vm1093, %v1565, 0
      %v1613 = vsel %vm1093, %v1566, 0
      %1615 = vmatprep.subr.mxu0 0.0
      %1616 = vmatpush1.msra.mxu0 0.0
      %1617 = vmatprep.subr.mxu0 0.0
      %1618 = vmatpush1.msra.mxu0 0.0
      %1619 = vmatprep.subr.mxu0 0.0
      %1620 = vmatpush1.msra.mxu0 0.0
      %1621 = vmatprep.subr.mxu0 0.0
      %1622 = vmatpush1.msra.mxu0 0.0
      %1623 = vmatprep.subr.mxu0 0.0
      %1624 = vmatpush1.msra.mxu0 0.0
      %1625 = vmatprep.subr.mxu0 0.0
      %1626 = vmatpush1.msra.mxu0 0.0
      %1627 = vmatprep.subr.mxu0 0.0
      %1628 = vmatpush1.msra.mxu0 0.0
      %1629 = vmatprep.subr.mxu0 0.0
      %1630 = vmatpush1.msra.mxu0 0.0
      %1631 = vmatprep.subr.mxu0 0.0
      %1632 = vmatpush1.msra.mxu0 0.0
      %1633 = vmatprep.subr.mxu0 0.0
      %1634 = vmatpush1.msra.mxu0 0.0
      %1635 = vmatprep.subr.mxu0 0.0
      %1636 = vmatpush1.msra.mxu0 0.0
      %1637 = vmatprep.subr.mxu0 0.0
      %1638 = vmatpush1.msra.mxu0 0.0
      %1639 = vmatprep.subr.mxu0 0.0
      %1640 = vmatpush1.msra.mxu0 0.0
      %1641 = vmatprep.subr.mxu0 0.0
      %1642 = vmatpush1.msra.mxu0 0.0
      %1643 = vmatprep.subr.mxu0 0.0
      %1644 = vmatpush1.msra.mxu0 0.0
      %1645 = vmatprep.subr.mxu0 0.0
      %1646 = vmatpush1.msra.mxu0 %v1144
      %1647 = vmatprep.subr.mxu0 0.0
      %1648 = vmatpush2.msra.mxu0 0.0
      %1649 = vmatprep.subr.mxu0 0.0
      %1650 = vmatpush2.msra.mxu0 0.0
      %1651 = vmatprep.subr.mxu0 0.0
      %1652 = vmatpush2.msra.mxu0 0.0
      %1653 = vmatprep.subr.mxu0 0.0
      %1654 = vmatpush2.msra.mxu0 0.0
      %1655 = vmatprep.subr.mxu0 0.0
      %1656 = vmatpush2.msra.mxu0 0.0
      %1657 = vmatprep.subr.mxu0 0.0
      %1658 = vmatpush2.msra.mxu0 0.0
      %1659 = vmatprep.subr.mxu0 0.0
      %1660 = vmatpush2.msra.mxu0 0.0
      %1661 = vmatprep.subr.mxu0 0.0
      %1662 = vmatpush2.msra.mxu0 0.0
      %1663 = vmatprep.subr.mxu0 0.0
      %1664 = vmatpush2.msra.mxu0 0.0
      %1665 = vmatprep.subr.mxu0 0.0
      %1666 = vmatpush2.msra.mxu0 0.0
      %1667 = vmatprep.subr.mxu0 0.0
      %1668 = vmatpush2.msra.mxu0 0.0
      %1669 = vmatprep.subr.mxu0 0.0
      %1670 = vmatpush2.msra.mxu0 0.0
      %1671 = vmatprep.subr.mxu0 0.0
      %1672 = vmatpush2.msra.mxu0 0.0
      %1673 = vmatprep.subr.mxu0 0.0
      %1674 = vmatpush2.msra.mxu0 0.0
      %1675 = vmatprep.subr.mxu0 0.0
      %1676 = vmatpush2.msra.mxu0 0.0
      %1677 = vmatprep.subr.mxu0 0.0
      %1678 = vmatpush2.msra.mxu0 0.0
      %1679 = vmatprep.mubr.f32.mxu0 0.0
      %1680 = vmatmul.mubr.f32.gmra.mxu0 %v1568
      %v1681 = vpop.f32.mrf.mxu0
      %v1682 = vadd.f32 0.0, %v1681
      %v1683 = vpop.f32.mrf.mxu0
      %1684 = vmatprep.mubr.f32.mxu0 0.0
      %1685 = vmatmul.mubr.f32.gmra.mxu0 %v1571
      %v1686 = vpop.f32.mrf.mxu0
      %v1687 = vadd.f32 0.0, %v1686
      %v1688 = vpop.f32.mrf.mxu0
      %1689 = vmatprep.mubr.f32.mxu0 0.0
      %1690 = vmatmul.mubr.f32.gmra.mxu0 %v1574
      %v1691 = vpop.f32.mrf.mxu0
      %v1692 = vadd.f32 0.0, %v1691
      %v1693 = vpop.f32.mrf.mxu0
      %1694 = vmatprep.mubr.f32.mxu0 0.0
      %1695 = vmatmul.mubr.f32.gmra.mxu0 %v1577
      %v1696 = vpop.f32.mrf.mxu0
      %v1697 = vadd.f32 0.0, %v1696
      %v1698 = vpop.f32.mrf.mxu0
      %1699 = vmatprep.mubr.f32.mxu0 0.0
      %1700 = vmatmul.mubr.f32.gmra.mxu0 %v1580
      %v1701 = vpop.f32.mrf.mxu0
      %v1702 = vadd.f32 0.0, %v1701
      %v1703 = vpop.f32.mrf.mxu0
      %1704 = vmatprep.mubr.f32.mxu0 0.0
      %1705 = vmatmul.mubr.f32.gmra.mxu0 %v1583
      %v1706 = vpop.f32.mrf.mxu0
      %v1707 = vadd.f32 0.0, %v1706
      %v1708 = vpop.f32.mrf.mxu0
      %1709 = vmatprep.mubr.f32.mxu0 0.0
      %1710 = vmatmul.mubr.f32.gmra.mxu0 %v1586
      %v1711 = vpop.f32.mrf.mxu0
      %v1712 = vadd.f32 0.0, %v1711
      %v1713 = vpop.f32.mrf.mxu0
      %1714 = vmatprep.mubr.f32.mxu0 0.0
      %1715 = vmatmul.mubr.f32.gmra.mxu0 %v1589
      %v1716 = vpop.f32.mrf.mxu0
      %v1717 = vadd.f32 0.0, %v1716
      %v1718 = vpop.f32.mrf.mxu0
      %1719 = vmatprep.mubr.f32.mxu0 0.0
      %1720 = vmatmul.mubr.f32.gmra.mxu0 %v1592
      %v1721 = vpop.f32.mrf.mxu0
      %v1722 = vadd.f32 0.0, %v1721
      %v1723 = vpop.f32.mrf.mxu0
      %1724 = vmatprep.mubr.f32.mxu0 0.0
      %1725 = vmatmul.mubr.f32.gmra.mxu0 %v1595
      %v1726 = vpop.f32.mrf.mxu0
      %v1727 = vadd.f32 0.0, %v1726
      %v1728 = vpop.f32.mrf.mxu0
      %1729 = vmatprep.mubr.f32.mxu0 0.0
      %1730 = vmatmul.mubr.f32.gmra.mxu0 %v1598
      %v1731 = vpop.f32.mrf.mxu0
      %v1732 = vadd.f32 0.0, %v1731
      %v1733 = vpop.f32.mrf.mxu0
      %1734 = vmatprep.mubr.f32.mxu0 0.0
      %1735 = vmatmul.mubr.f32.gmra.mxu0 %v1601
      %v1736 = vpop.f32.mrf.mxu0
      %v1737 = vadd.f32 0.0, %v1736
      %v1738 = vpop.f32.mrf.mxu0
      %1739 = vmatprep.mubr.f32.mxu0 0.0
      %1740 = vmatmul.mubr.f32.gmra.mxu0 %v1604
      %v1741 = vpop.f32.mrf.mxu0
      %v1742 = vadd.f32 0.0, %v1741
      %v1743 = vpop.f32.mrf.mxu0
      %1744 = vmatprep.mubr.f32.mxu0 0.0
      %1745 = vmatmul.mubr.f32.gmra.mxu0 %v1607
      %v1746 = vpop.f32.mrf.mxu0
      %v1747 = vadd.f32 0.0, %v1746
      %v1748 = vpop.f32.mrf.mxu0
      %1749 = vmatprep.mubr.f32.mxu0 0.0
      %1750 = vmatmul.mubr.f32.gmra.mxu0 %v1610
      %v1751 = vpop.f32.mrf.mxu0
      %v1752 = vadd.f32 0.0, %v1751
      %v1753 = vpop.f32.mrf.mxu0
      %1754 = vmatprep.mubr.f32.mxu0 0.0
      %1755 = vmatmul.mubr.f32.gmra.mxu0 %v1613
      %v1756 = vpop.f32.mrf.mxu0
      %v1757 = vadd.f32 0.0, %v1756
      %v1758 = vpop.f32.mrf.mxu0
      %1759 = vdwg.mxu0
      %v1760 = vsub.f32 %v1519, %v1682
      %v1761 = vsub.f32 %v1520, %v1687
      %v1762 = vsub.f32 %v1521, %v1692
      %v1763 = vsub.f32 %v1522, %v1697
      %v1764 = vsub.f32 %v1523, %v1702
      %v1765 = vsub.f32 %v1524, %v1707
      %v1766 = vsub.f32 %v1525, %v1712
      %v1767 = vsub.f32 %v1526, %v1717
      %v1768 = vsub.f32 %v1527, %v1722
      %v1769 = vsub.f32 %v1528, %v1727
      %v1770 = vsub.f32 %v1529, %v1732
      %v1771 = vsub.f32 %v1530, %v1737
      %v1772 = vsub.f32 %v1531, %v1742
      %v1773 = vsub.f32 %v1532, %v1747
      %v1774 = vsub.f32 %v1533, %v1752
      %v1775 = vsub.f32 %v1534, %v1757
      %v1776 = vmul.f32 %v1291, %v1291
      %v1777 = vmul.f32 %v1292, %v1292
      %v1778 = vmul.f32 %v1293, %v1293
      %v1779 = vmul.f32 %v1294, %v1294
      %v1780 = vmul.f32 %v1295, %v1295
      %v1781 = vmul.f32 %v1296, %v1296
      %v1782 = vmul.f32 %v1297, %v1297
      %v1783 = vmul.f32 %v1298, %v1298
      %v1784 = vmul.f32 %v1299, %v1299
      %v1785 = vmul.f32 %v1300, %v1300
      %v1786 = vmul.f32 %v1301, %v1301
      %v1787 = vmul.f32 %v1302, %v1302
      %v1788 = vmul.f32 %v1303, %v1303
      %v1789 = vmul.f32 %v1304, %v1304
      %v1790 = vmul.f32 %v1305, %v1305
      %v1791 = vmul.f32 %v1306, %v1306
      %v1792 = vadd.f32 %v1776, %v1777
      %v1793 = vadd.f32 %v1792, %v1778
      %v1794 = vadd.f32 %v1793, %v1779
      %v1795 = vadd.f32 %v1794, %v1780
      %v1796 = vadd.f32 %v1795, %v1781
      %v1797 = vadd.f32 %v1796, %v1782
      %v1798 = vadd.f32 %v1797, %v1783
      %v1799 = vadd.f32 %v1798, %v1784
      %v1800 = vadd.f32 %v1799, %v1785
      %v1801 = vadd.f32 %v1800, %v1786
      %v1802 = vadd.f32 %v1801, %v1787
      %v1803 = vadd.f32 %v1802, %v1788
      %v1804 = vadd.f32 %v1803, %v1789
      %v1805 = vadd.f32 %v1804, %v1790
      %v1806 = vadd.f32 %v1805, %v1791
      %1807 = vadd.xlane.f32.xlu0 %v1806
      %v1808 = vpop.xlane.xlu0 %1807
      %v1809 = vrot.slane %v1808, 4
      %v1810 = vadd.f32 %v1808, %v1809
      %v1811 = vrot.slane %v1810, 2
      %v1812 = vadd.f32 %v1810, %v1811
      %v1813 = vrot.slane %v1812, 1
      %v1814 = vadd.f32 %v1812, %v1813
      %s1815 = vtos %v1814
      %v1816 = vstv %s1815
      %v1817 = vrsqrt.pop %v1816
      %v1818 = vmul.f32 %v1816, %v1817
      %vm1819 = vcmp.eq.f32.partialorder %v1816, inf
      %v1820 = vsel %vm1819, %v1816, %v1818
      %vm1821 = vcmp.eq.f32.partialorder %v1816, 0.0
      %v1822 = vand.u32 %v1816, 2147483648
      %v1823 = vsel %vm1821, %v1822, %v1820
      %v1824 = vmul.f32 %v1487, %v1487
      %v1825 = vmul.f32 %v1488, %v1488
      %v1826 = vmul.f32 %v1489, %v1489
      %v1827 = vmul.f32 %v1490, %v1490
      %v1828 = vmul.f32 %v1491, %v1491
      %v1829 = vmul.f32 %v1492, %v1492
      %v1830 = vmul.f32 %v1493, %v1493
      %v1831 = vmul.f32 %v1494, %v1494
      %v1832 = vmul.f32 %v1495, %v1495
      %v1833 = vmul.f32 %v1496, %v1496
      %v1834 = vmul.f32 %v1497, %v1497
      %v1835 = vmul.f32 %v1498, %v1498
      %v1836 = vmul.f32 %v1499, %v1499
      %v1837 = vmul.f32 %v1500, %v1500
      %v1838 = vmul.f32 %v1501, %v1501
      %v1839 = vmul.f32 %v1502, %v1502
      %v1840 = vadd.f32 %v1824, %v1825
      %v1841 = vadd.f32 %v1840, %v1826
      %v1842 = vadd.f32 %v1841, %v1827
      %v1843 = vadd.f32 %v1842, %v1828
      %v1844 = vadd.f32 %v1843, %v1829
      %v1845 = vadd.f32 %v1844, %v1830
      %v1846 = vadd.f32 %v1845, %v1831
      %v1847 = vadd.f32 %v1846, %v1832
      %v1848 = vadd.f32 %v1847, %v1833
      %v1849 = vadd.f32 %v1848, %v1834
      %v1850 = vadd.f32 %v1849, %v1835
      %v1851 = vadd.f32 %v1850, %v1836
      %v1852 = vadd.f32 %v1851, %v1837
      %v1853 = vadd.f32 %v1852, %v1838
      %v1854 = vadd.f32 %v1853, %v1839
      %1855 = vadd.xlane.f32.xlu0 %v1854
      %v1856 = vpop.xlane.xlu0 %1855
      %v1857 = vrot.slane %v1856, 4
      %v1858 = vadd.f32 %v1856, %v1857
      %v1859 = vrot.slane %v1858, 2
      %v1860 = vadd.f32 %v1858, %v1859
      %v1861 = vrot.slane %v1860, 1
      %v1862 = vadd.f32 %v1860, %v1861
      %s1863 = vtos %v1862
      %v1864 = vstv %s1863
      %v1865 = vrsqrt.pop %v1864
      %v1866 = vmul.f32 %v1864, %v1865
      %vm1867 = vcmp.eq.f32.partialorder %v1864, inf
      %v1868 = vsel %vm1867, %v1864, %v1866
      %vm1869 = vcmp.eq.f32.partialorder %v1864, 0.0
      %v1870 = vand.u32 %v1864, 2147483648
      %v1871 = vsel %vm1869, %v1870, %v1868
      %v1872 = vadd.f32 %v1871, 6.25e-10
      %v1873 = vmul.f32 %v1760, %v1760
      %v1874 = vmul.f32 %v1761, %v1761
      %v1875 = vmul.f32 %v1762, %v1762
      %v1876 = vmul.f32 %v1763, %v1763
      %v1877 = vmul.f32 %v1764, %v1764
      %v1878 = vmul.f32 %v1765, %v1765
      %v1879 = vmul.f32 %v1766, %v1766
      %v1880 = vmul.f32 %v1767, %v1767
      %v1881 = vmul.f32 %v1768, %v1768
      %v1882 = vmul.f32 %v1769, %v1769
      %v1883 = vmul.f32 %v1770, %v1770
      %v1884 = vmul.f32 %v1771, %v1771
      %v1885 = vmul.f32 %v1772, %v1772
      %v1886 = vmul.f32 %v1773, %v1773
      %v1887 = vmul.f32 %v1774, %v1774
      %v1888 = vmul.f32 %v1775, %v1775
      %v1889 = vadd.f32 %v1873, %v1874
      %v1890 = vadd.f32 %v1889, %v1875
      %v1891 = vadd.f32 %v1890, %v1876
      %v1892 = vadd.f32 %v1891, %v1877
      %v1893 = vadd.f32 %v1892, %v1878
      %v1894 = vadd.f32 %v1893, %v1879
      %v1895 = vadd.f32 %v1894, %v1880
      %v1896 = vadd.f32 %v1895, %v1881
      %v1897 = vadd.f32 %v1896, %v1882
      %v1898 = vadd.f32 %v1897, %v1883
      %v1899 = vadd.f32 %v1898, %v1884
      %v1900 = vadd.f32 %v1899, %v1885
      %v1901 = vadd.f32 %v1900, %v1886
      %v1902 = vadd.f32 %v1901, %v1887
      %v1903 = vadd.f32 %v1902, %v1888
      %1904 = vadd.xlane.f32.xlu0 %v1903
      %v1905 = vpop.xlane.xlu0 %1904
      %v1906 = vrot.slane %v1905, 4
      %v1907 = vadd.f32 %v1905, %v1906
      %v1908 = vrot.slane %v1907, 2
      %v1909 = vadd.f32 %v1907, %v1908
      %v1910 = vrot.slane %v1909, 1
      %v1911 = vadd.f32 %v1909, %v1910
      %s1912 = vtos %v1911
      %v1913 = vstv %s1912
      %v1914 = vrsqrt.pop %v1913
      %v1915 = vmul.f32 %v1913, %v1914
      %vm1916 = vcmp.eq.f32.partialorder %v1913, inf
      %v1917 = vsel %vm1916, %v1913, %v1915
      %vm1918 = vcmp.eq.f32.partialorder %v1913, 0.0
      %v1919 = vand.u32 %v1913, 2147483648
      %v1920 = vsel %vm1918, %v1919, %v1917
      %v1921 = vadd.f32 %v1920, 6.25e-10
      %v1922 = vmul.f32 %v1872, %v1921
      %v1923 = vrsqrt.pop %v1922
      %v1924 = vmul.f32 %v1922, %v1923
      %vm1925 = vcmp.eq.f32.partialorder %v1922, inf
      %v1926 = vsel %vm1925, %v1922, %v1924
      %vm1927 = vcmp.eq.f32.partialorder %v1922, 0.0
      %v1928 = vand.u32 %v1922, 2147483648
      %v1929 = vsel %vm1927, %v1928, %v1926
      %v1930 = vrcp.pop %v1929
      %v1931 = vmul.f32 %v1823, %v1930
      %v1932 = vsub.f32 1.0, %v1931
      %vm1933 = vcmask 0
      %1934 = vst.msk [vmem:[#allocation13] sm:$0x1] %vm1933, %v1932
    $region37: #{tpu_custom_call.1} parent=1 // pred_fallthru
      _
    // Predicated region
    $region38: #{tpu_custom_call.1} parent=1 // pred_check
      _
    $region39: #{tpu_custom_call.1} parent=1 // pred_check_branch
      %1936 = sbr.rel (0) target = $region41
    $region40: #{tpu_custom_call.1} parent=1 // pred_region
      %s1938 = ssub.s32 16, 16
      %1939 = vsyncadd [#allocation9], %s1938
      %s1941 = sshll.u32 [#allocation13], 4
      %s1942 = int_to_ptr.vmem [resolvable:$true] %s1941
      %1944 = dma.vmem_to_hbm [thread:$0]  %s1942, 16, %s4, [#allocation9]
    $region41: #{tpu_custom_call.1} parent=1 // pred_fallthru
      _
    // Predicated region
    $region42: #{tpu_custom_call.1} parent=1 // pred_check
      _
    $region43: #{tpu_custom_call.1} parent=1 // pred_check_branch
      %1946 = sbr.rel (0) target = $region45
    $region44: #{tpu_custom_call.1} parent=1 // pred_region
      %1947 = dma.done [#allocation9], 16
    $region45: #{tpu_custom_call.1} parent=1 // pred_fallthru
      _
    %1948 = vsyncpa [#allocation8], 1
    %1949 = vsyncpa [#allocation11], 1
    %1950 = vsyncpa [#allocation9], 1

</llo_original>
